<compile_context>
chip_gen: v5e
topology: v5e:2x2
jax: 0.10.0
libtpu: 0.0.40
codegen_flags: <defaults>
</compile_context>

<pallas_src>
import functools
import math

import jax
import jax.numpy as jnp
from jax.experimental import pallas as pl
from jax.experimental.pallas import tpu as pltpu

EPS = 1e-4           # EPS used by the rkn repo for norm clamping
INV_SQRT_EPS = 1e-2  # eps of ops.matrix_inverse_sqrt

# ---------------- module hyper-parameters (small, deterministic) -------------
INPUT_SIZE = 4
HIDDEN_SIZE = 32
KMER_SIZE = 2
GAP_PENALTY = 0.5
SIGMA = 0.5
# kernel_func='exp': kernel_args=[1/sigma^2], then divided by kmer_size
ALPHA = (1.0 / SIGMA ** 2) / KMER_SIZE
SEQ_LEN = 8
BATCH = 2

# Lane-dense output width: projected block [0,Hd) + raw-carry block [Hd,2Hd),
# rounded up to a multiple of 128 lanes (unmasked vst instead of vst.msk).
OUT_LANES = max(128, ((2 * HIDDEN_SIZE + 127) // 128) * 128)


# ----------------------------- fused Pallas kernel ---------------------------
def _rkn_fused_kernel(x_ref, w_ref, rhs_ref, out_ref, *,
                      alpha, gap, seq_len, batch, kmer, hidden):
    """conv (kappa) + RKN recurrence + projection, single invocation, no grid.

    x_ref   : (T*B, D)         input rows
    w_ref   : (D, K*Hd)        normalized weights, kmer-major cols, pre-scaled by alpha
    rhs_ref : (Hd, OUT_LANES)  [ lintrans | I_Hd | 0 ]  combined projection matrix
    out_ref : (T*B + K*B, OUT_LANES)
              rows [0, T*B)      cols [0,Hd)   : per-step hidden @ lintrans
              rows [T*B, +K*B)   cols [Hd,2Hd) : raw final carries (hx)
              rows [T*B+(K-1)*B,)cols [0,Hd)   : final hidden @ lintrans (output)
    """
    # ---- _conv_layer: norm * kappa(<x, w> / clamp(norm)) --------------------
    x = x_ref[...]                                              # (T*B, D)
    norm = jnp.sqrt(jnp.sum(x * x, axis=-1, keepdims=True))     # (T*B, 1)
    wt = w_ref[...]                                             # (D, K*Hd)
    # D is tiny (4): contract on the VPU as D broadcast FMAs; an MXU push/pop
    # for a 4-deep contraction would be pure pipeline-fill latency.
    dot = x[:, 0:1] * wt[0:1, :]
    for d in range(1, x.shape[-1]):
        dot = dot + x[:, d:d + 1] * wt[d:d + 1, :]              # (T*B, K*Hd)
    # Exact reciprocal (correctness fix): tiny (T*B,1) divide, EUP/VPU have
    # huge slack here, and it removes the approx-recip error amplified by exp.
    inv_norm = 1.0 / jnp.maximum(norm, EPS)
    # alpha already folded into wt -> exp(alpha*(<x,w>/clamp(norm) - 1))
    emb = norm * jnp.exp(dot * inv_norm - alpha)                # (T*B, K*Hd)

    # ---- RKN recurrence, fully unrolled; carry + hiddens stay in vregs ------
    c = [jnp.zeros((batch, hidden), jnp.float32) for _ in range(kmer)]  # h0=0
    hids = []
    for t in range(seq_len):
        emb_t = emb[t * batch:(t + 1) * batch, :]               # (B, K*Hd)
        new_c = []
        for k in range(kmer):
            e_k = emb_t[:, k * hidden:(k + 1) * hidden]         # (B, Hd)
            upd = e_k if k == 0 else e_k * c[k - 1]             # c[-1] := 1
            new_c.append(gap * c[k] + upd)
        c = new_c
        hids.append(c[kmer - 1])                                # keep in vregs

    # ---- one MXU matmul + one lane-dense store for EVERYTHING ---------------
    # stacked: per-step hiddens followed by all final carries   (T*B+K*B, Hd)
    stacked = jnp.concatenate(hids + c, axis=0)
    # rhs = [ lintrans | I | 0 ]  -> cols [0,Hd) projected, cols [Hd,2Hd) raw
    out_ref[...] = jnp.dot(stacked, rhs_ref[...],
                           preferred_element_type=jnp.float32)


# ------------------------------ plain-JAX pieces -----------------------------
def compute_lintrans(wn, alpha):
    """_compute_lintrans: kappa(W_k W_k^T).prod(k) -> matrix inverse sqrt."""
    # TODO(synk): ops.matrix_inverse_sqrt needs an eigendecomposition; there is
    # no Pallas equivalent, so the tiny (Hd x Hd) lintrans stays in XLA.
    w = jnp.transpose(wn, (1, 0, 2))                      # (K, Hd, D)
    gram = jnp.einsum('kid,kjd->kij', w, w)               # W_k W_k^T
    gram = jnp.exp(alpha * (gram - 1.0))                  # kappa (exp kernel)
    lint = jnp.prod(gram, axis=0)                         # additive=False
    e, v = jnp.linalg.eigh(lint)
    e_rsqrt = 1.0 / (jnp.sqrt(jnp.maximum(e, 0.0)) + INV_SQRT_EPS)
    lin = (v * e_rsqrt[None, :]) @ v.T
    # Exact symmetry: F.linear(., lintrans) == (.) @ lintrans, and
    # torch.mm(final_hidden, lintrans) == outputs[-1].
    return 0.5 * (lin + lin.T)


def rkn_layer_forward(x, weight):
    """x: (T, B, input_size) -> (output (B,Hd), outputs (T,B,Hd), hx (B,Hd,K))."""
    T, B, D = x.shape
    Hd, K, _ = weight.shape

    # normalize_(): unit-norm weight rows along the input dimension
    wn = weight / jnp.maximum(
        jnp.linalg.norm(weight, axis=-1, keepdims=True), EPS)

    lintrans = compute_lintrans(wn, ALPHA)                # (Hd, Hd) symmetric

    x2d = x.reshape(T * B, D)
    # kmer-major columns: col (k*Hd + h) == wn[h, k, :]; ALPHA folded in here
    # (one multiply on a (K*Hd, D) array in XLA, removed from the kernel VPU path).
    w_t = ALPHA * jnp.transpose(wn, (1, 0, 2)).reshape(K * Hd, D).T   # (D, K*Hd)

    # Combined RHS for the single in-kernel matmul:
    #   cols [0, Hd)    = lintrans   (projection of the last-kmer hiddens)
    #   cols [Hd, 2Hd)  = identity   (raw passthrough for the hx rows)
    rhs = jnp.zeros((Hd, OUT_LANES), jnp.float32)
    rhs = rhs.at[:, :Hd].set(lintrans)
    rhs = rhs.at[:, Hd:2 * Hd].set(jnp.eye(Hd, dtype=jnp.float32))

    out = pl.pallas_call(
        functools.partial(_rkn_fused_kernel, alpha=ALPHA, gap=GAP_PENALTY,
                          seq_len=T, batch=B, kmer=K, hidden=Hd),
        out_shape=jax.ShapeDtypeStruct((T * B + K * B, OUT_LANES), jnp.float32),
        # No grid: single invocation, whole arrays resident in VMEM, no
        # pipeline prologue / double buffers for a grid that never advances.
        in_specs=[pl.BlockSpec(memory_space=pltpu.MemorySpace.VMEM)] * 3,
        out_specs=pl.BlockSpec(memory_space=pltpu.MemorySpace.VMEM),
    )(x2d, w_t, rhs)

    outputs = out[:T * B, :Hd].reshape(T, B, Hd)          # F.linear(hiddens, lintrans)
    output = out[T * B + (K - 1) * B:, :Hd]               # mm(final_hidden, lintrans)
    hx = out[T * B:, Hd:2 * Hd].reshape(K, B, Hd).transpose(1, 2, 0)  # (B, Hd, K)
    return output, outputs, hx


# --------------------------- pure-JAX reference ------------------------------
def reference_forward(x, weight):
    T, B, D = x.shape
    Hd, K, _ = weight.shape
    wn = weight / jnp.maximum(
        jnp.linalg.norm(weight, axis=-1, keepdims=True), EPS)
    lin = compute_lintrans(wn, ALPHA)
    norm = jnp.linalg.norm(x, axis=-1, keepdims=True)[..., None]   # (T,B,1,1)
    dot = jnp.einsum('tbd,hkd->tbhk', x, wn)                       # (T,B,Hd,K)
    emb = norm * jnp.exp(ALPHA * (dot / jnp.maximum(norm, EPS) - 1.0))
    c = jnp.zeros((B, Hd, K), jnp.float32)
    outs = []
    for t in range(T):
        shifted = jnp.concatenate(
            [jnp.ones_like(c[..., :1]), c[..., :-1]], axis=-1)
        c = GAP_PENALTY * c + emb[t] * shifted
        outs.append(c[..., K - 1])
    outputs = jnp.stack(outs, axis=0) @ lin.T                      # F.linear
    output = c[..., K - 1] @ lin                                   # torch.mm
    return output, outputs, c


if __name__ == "__main__":
    key = jax.random.PRNGKey(0)
    kx, kw = jax.random.split(key)
    x = jax.random.normal(kx, (SEQ_LEN, BATCH, INPUT_SIZE), dtype=jnp.float32)
    stdv = 1.0 / math.sqrt(HIDDEN_SIZE)
    weight = jax.random.uniform(kw, (HIDDEN_SIZE, KMER_SIZE, INPUT_SIZE),
                                dtype=jnp.float32, minval=-stdv, maxval=stdv)

    fwd = jax.jit(rkn_layer_forward)
    output, outputs, hx = fwd(x, weight)
    jax.block_until_ready((output, outputs, hx))

    assert output.shape == (BATCH, HIDDEN_SIZE)
    assert outputs.shape == (SEQ_LEN, BATCH, HIDDEN_SIZE)
    assert hx.shape == (BATCH, HIDDEN_SIZE, KMER_SIZE)
    assert jnp.all(jnp.isfinite(output)) and jnp.all(jnp.isfinite(outputs))
    assert jnp.all(jnp.isfinite(hx))

    # Tightened vs the previous version (exact 1/norm instead of approx EUP
    # reciprocal); remaining slack covers MXU default-precision rounding.
    r_out, r_outs, r_hx = jax.jit(reference_forward)(x, weight)
    assert jnp.allclose(output, r_out, rtol=1e-2, atol=1e-2)
    assert jnp.allclose(outputs, r_outs, rtol=1e-2, atol=1e-2)
    assert jnp.allclose(hx, r_hx, rtol=1e-2, atol=1e-2)

    print("KERNEL_OK")
</pallas_src>

<mosaic_0001>
module attributes {stable_mosaic.version = 11 : i64} {
  func.func @_rkn_fused_kernel(%arg0: memref<16x4xf32, #tpu.memory_space<vmem>>, %arg1: memref<4x64xf32, #tpu.memory_space<vmem>>, %arg2: memref<32x128xf32, #tpu.memory_space<vmem>>, %arg3: memref<20x128xf32, #tpu.memory_space<vmem>>) attributes {dimension_semantics = [], scalar_prefetch = 0 : i64, scratch_operands = 0 : i64, tpu.core_type = #tpu.core_type<tc>} {
    %c0 = arith.constant 0 : index
    %c0_0 = arith.constant 0 : index
    %0 = vector.load %arg0[%c0, %c0_0] : memref<16x4xf32, #tpu.memory_space<vmem>>, vector<16x4xf32>
    %1 = arith.mulf %0, %0 : vector<16x4xf32>
    %cst = arith.constant dense<0.000000e+00> : vector<16xf32>
    %2 = vector.multi_reduction <add>, %1, %cst [1] : vector<16x4xf32> to vector<16xf32>
    %3 = vector.shape_cast %2 : vector<16xf32> to vector<16x1xf32>
    %4 = math.sqrt %3 : vector<16x1xf32>
    %c0_1 = arith.constant 0 : index
    %c0_2 = arith.constant 0 : index
    %5 = vector.load %arg1[%c0_1, %c0_2] : memref<4x64xf32, #tpu.memory_space<vmem>>, vector<4x64xf32>
    %6 = vector.extract_strided_slice %0 {offsets = [0, 0], sizes = [16, 1], strides = [1, 1]} : vector<16x4xf32> to vector<16x1xf32>
    %7 = vector.extract_strided_slice %5 {offsets = [0, 0], sizes = [1, 64], strides = [1, 1]} : vector<4x64xf32> to vector<1x64xf32>
    %8 = vector.broadcast %6 : vector<16x1xf32> to vector<16x64xf32>
    %9 = vector.broadcast %7 : vector<1x64xf32> to vector<16x64xf32>
    %10 = arith.mulf %8, %9 : vector<16x64xf32>
    %11 = vector.extract_strided_slice %0 {offsets = [0, 1], sizes = [16, 1], strides = [1, 1]} : vector<16x4xf32> to vector<16x1xf32>
    %12 = vector.extract_strided_slice %5 {offsets = [1, 0], sizes = [1, 64], strides = [1, 1]} : vector<4x64xf32> to vector<1x64xf32>
    %13 = vector.broadcast %11 : vector<16x1xf32> to vector<16x64xf32>
    %14 = vector.broadcast %12 : vector<1x64xf32> to vector<16x64xf32>
    %15 = arith.mulf %13, %14 : vector<16x64xf32>
    %16 = arith.addf %10, %15 : vector<16x64xf32>
    %17 = vector.extract_strided_slice %0 {offsets = [0, 2], sizes = [16, 1], strides = [1, 1]} : vector<16x4xf32> to vector<16x1xf32>
    %18 = vector.extract_strided_slice %5 {offsets = [2, 0], sizes = [1, 64], strides = [1, 1]} : vector<4x64xf32> to vector<1x64xf32>
    %19 = vector.broadcast %17 : vector<16x1xf32> to vector<16x64xf32>
    %20 = vector.broadcast %18 : vector<1x64xf32> to vector<16x64xf32>
    %21 = arith.mulf %19, %20 : vector<16x64xf32>
    %22 = arith.addf %16, %21 : vector<16x64xf32>
    %23 = vector.extract_strided_slice %0 {offsets = [0, 3], sizes = [16, 1], strides = [1, 1]} : vector<16x4xf32> to vector<16x1xf32>
    %24 = vector.extract_strided_slice %5 {offsets = [3, 0], sizes = [1, 64], strides = [1, 1]} : vector<4x64xf32> to vector<1x64xf32>
    %25 = vector.broadcast %23 : vector<16x1xf32> to vector<16x64xf32>
    %26 = vector.broadcast %24 : vector<1x64xf32> to vector<16x64xf32>
    %27 = arith.mulf %25, %26 : vector<16x64xf32>
    %28 = arith.addf %22, %27 : vector<16x64xf32>
    %cst_3 = arith.constant 9.99999974E-5 : f32
    %29 = vector.broadcast %cst_3 : f32 to vector<16x1xf32>
    %30 = arith.maximumf %4, %29 : vector<16x1xf32>
    %cst_4 = arith.constant 1.000000e+00 : f32
    %31 = vector.broadcast %cst_4 : f32 to vector<16x1xf32>
    %32 = arith.divf %31, %30 : vector<16x1xf32>
    %33 = vector.broadcast %32 : vector<16x1xf32> to vector<16x64xf32>
    %34 = arith.mulf %28, %33 : vector<16x64xf32>
    %cst_5 = arith.constant 2.000000e+00 : f32
    %35 = vector.broadcast %cst_5 : f32 to vector<16x64xf32>
    %36 = arith.subf %34, %35 : vector<16x64xf32>
    %37 = math.exp %36 : vector<16x64xf32>
    %38 = vector.broadcast %4 : vector<16x1xf32> to vector<16x64xf32>
    %39 = arith.mulf %38, %37 : vector<16x64xf32>
    %cst_6 = arith.constant 0.000000e+00 : f32
    %40 = vector.broadcast %cst_6 : f32 to vector<2x32xf32>
    %cst_7 = arith.constant 0.000000e+00 : f32
    %41 = vector.broadcast %cst_7 : f32 to vector<2x32xf32>
    %42 = vector.extract_strided_slice %39 {offsets = [0, 0], sizes = [2, 64], strides = [1, 1]} : vector<16x64xf32> to vector<2x64xf32>
    %43 = vector.extract_strided_slice %42 {offsets = [0, 0], sizes = [2, 32], strides = [1, 1]} : vector<2x64xf32> to vector<2x32xf32>
    %cst_8 = arith.constant 5.000000e-01 : f32
    %44 = vector.broadcast %cst_8 : f32 to vector<2x32xf32>
    %45 = arith.mulf %44, %40 : vector<2x32xf32>
    %46 = arith.addf %45, %43 : vector<2x32xf32>
    %47 = vector.extract_strided_slice %42 {offsets = [0, 32], sizes = [2, 32], strides = [1, 1]} : vector<2x64xf32> to vector<2x32xf32>
    %48 = arith.mulf %47, %40 : vector<2x32xf32>
    %cst_9 = arith.constant 5.000000e-01 : f32
    %49 = vector.broadcast %cst_9 : f32 to vector<2x32xf32>
    %50 = arith.mulf %49, %41 : vector<2x32xf32>
    %51 = arith.addf %50, %48 : vector<2x32xf32>
    %52 = vector.extract_strided_slice %39 {offsets = [2, 0], sizes = [2, 64], strides = [1, 1]} : vector<16x64xf32> to vector<2x64xf32>
    %53 = vector.extract_strided_slice %52 {offsets = [0, 0], sizes = [2, 32], strides = [1, 1]} : vector<2x64xf32> to vector<2x32xf32>
    %cst_10 = arith.constant 5.000000e-01 : f32
    %54 = vector.broadcast %cst_10 : f32 to vector<2x32xf32>
    %55 = arith.mulf %54, %46 : vector<2x32xf32>
    %56 = arith.addf %55, %53 : vector<2x32xf32>
    %57 = vector.extract_strided_slice %52 {offsets = [0, 32], sizes = [2, 32], strides = [1, 1]} : vector<2x64xf32> to vector<2x32xf32>
    %58 = arith.mulf %57, %46 : vector<2x32xf32>
    %cst_11 = arith.constant 5.000000e-01 : f32
    %59 = vector.broadcast %cst_11 : f32 to vector<2x32xf32>
    %60 = arith.mulf %59, %51 : vector<2x32xf32>
    %61 = arith.addf %60, %58 : vector<2x32xf32>
    %62 = vector.extract_strided_slice %39 {offsets = [4, 0], sizes = [2, 64], strides = [1, 1]} : vector<16x64xf32> to vector<2x64xf32>
    %63 = vector.extract_strided_slice %62 {offsets = [0, 0], sizes = [2, 32], strides = [1, 1]} : vector<2x64xf32> to vector<2x32xf32>
    %cst_12 = arith.constant 5.000000e-01 : f32
    %64 = vector.broadcast %cst_12 : f32 to vector<2x32xf32>
    %65 = arith.mulf %64, %56 : vector<2x32xf32>
    %66 = arith.addf %65, %63 : vector<2x32xf32>
    %67 = vector.extract_strided_slice %62 {offsets = [0, 32], sizes = [2, 32], strides = [1, 1]} : vector<2x64xf32> to vector<2x32xf32>
    %68 = arith.mulf %67, %56 : vector<2x32xf32>
    %cst_13 = arith.constant 5.000000e-01 : f32
    %69 = vector.broadcast %cst_13 : f32 to vector<2x32xf32>
    %70 = arith.mulf %69, %61 : vector<2x32xf32>
    %71 = arith.addf %70, %68 : vector<2x32xf32>
    %72 = vector.extract_strided_slice %39 {offsets = [6, 0], sizes = [2, 64], strides = [1, 1]} : vector<16x64xf32> to vector<2x64xf32>
    %73 = vector.extract_strided_slice %72 {offsets = [0, 0], sizes = [2, 32], strides = [1, 1]} : vector<2x64xf32> to vector<2x32xf32>
    %cst_14 = arith.constant 5.000000e-01 : f32
    %74 = vector.broadcast %cst_14 : f32 to vector<2x32xf32>
    %75 = arith.mulf %74, %66 : vector<2x32xf32>
    %76 = arith.addf %75, %73 : vector<2x32xf32>
    %77 = vector.extract_strided_slice %72 {offsets = [0, 32], sizes = [2, 32], strides = [1, 1]} : vector<2x64xf32> to vector<2x32xf32>
    %78 = arith.mulf %77, %66 : vector<2x32xf32>
    %cst_15 = arith.constant 5.000000e-01 : f32
    %79 = vector.broadcast %cst_15 : f32 to vector<2x32xf32>
    %80 = arith.mulf %79, %71 : vector<2x32xf32>
    %81 = arith.addf %80, %78 : vector<2x32xf32>
    %82 = vector.extract_strided_slice %39 {offsets = [8, 0], sizes = [2, 64], strides = [1, 1]} : vector<16x64xf32> to vector<2x64xf32>
    %83 = vector.extract_strided_slice %82 {offsets = [0, 0], sizes = [2, 32], strides = [1, 1]} : vector<2x64xf32> to vector<2x32xf32>
    %cst_16 = arith.constant 5.000000e-01 : f32
    %84 = vector.broadcast %cst_16 : f32 to vector<2x32xf32>
    %85 = arith.mulf %84, %76 : vector<2x32xf32>
    %86 = arith.addf %85, %83 : vector<2x32xf32>
    %87 = vector.extract_strided_slice %82 {offsets = [0, 32], sizes = [2, 32], strides = [1, 1]} : vector<2x64xf32> to vector<2x32xf32>
    %88 = arith.mulf %87, %76 : vector<2x32xf32>
    %cst_17 = arith.constant 5.000000e-01 : f32
    %89 = vector.broadcast %cst_17 : f32 to vector<2x32xf32>
    %90 = arith.mulf %89, %81 : vector<2x32xf32>
    %91 = arith.addf %90, %88 : vector<2x32xf32>
    %92 = vector.extract_strided_slice %39 {offsets = [10, 0], sizes = [2, 64], strides = [1, 1]} : vector<16x64xf32> to vector<2x64xf32>
    %93 = vector.extract_strided_slice %92 {offsets = [0, 0], sizes = [2, 32], strides = [1, 1]} : vector<2x64xf32> to vector<2x32xf32>
    %cst_18 = arith.constant 5.000000e-01 : f32
    %94 = vector.broadcast %cst_18 : f32 to vector<2x32xf32>
    %95 = arith.mulf %94, %86 : vector<2x32xf32>
    %96 = arith.addf %95, %93 : vector<2x32xf32>
    %97 = vector.extract_strided_slice %92 {offsets = [0, 32], sizes = [2, 32], strides = [1, 1]} : vector<2x64xf32> to vector<2x32xf32>
    %98 = arith.mulf %97, %86 : vector<2x32xf32>
    %cst_19 = arith.constant 5.000000e-01 : f32
    %99 = vector.broadcast %cst_19 : f32 to vector<2x32xf32>
    %100 = arith.mulf %99, %91 : vector<2x32xf32>
    %101 = arith.addf %100, %98 : vector<2x32xf32>
    %102 = vector.extract_strided_slice %39 {offsets = [12, 0], sizes = [2, 64], strides = [1, 1]} : vector<16x64xf32> to vector<2x64xf32>
    %103 = vector.extract_strided_slice %102 {offsets = [0, 0], sizes = [2, 32], strides = [1, 1]} : vector<2x64xf32> to vector<2x32xf32>
    %cst_20 = arith.constant 5.000000e-01 : f32
    %104 = vector.broadcast %cst_20 : f32 to vector<2x32xf32>
    %105 = arith.mulf %104, %96 : vector<2x32xf32>
    %106 = arith.addf %105, %103 : vector<2x32xf32>
    %107 = vector.extract_strided_slice %102 {offsets = [0, 32], sizes = [2, 32], strides = [1, 1]} : vector<2x64xf32> to vector<2x32xf32>
    %108 = arith.mulf %107, %96 : vector<2x32xf32>
    %cst_21 = arith.constant 5.000000e-01 : f32
    %109 = vector.broadcast %cst_21 : f32 to vector<2x32xf32>
    %110 = arith.mulf %109, %101 : vector<2x32xf32>
    %111 = arith.addf %110, %108 : vector<2x32xf32>
    %112 = vector.extract_strided_slice %39 {offsets = [14, 0], sizes = [2, 64], strides = [1, 1]} : vector<16x64xf32> to vector<2x64xf32>
    %113 = vector.extract_strided_slice %112 {offsets = [0, 0], sizes = [2, 32], strides = [1, 1]} : vector<2x64xf32> to vector<2x32xf32>
    %cst_22 = arith.constant 5.000000e-01 : f32
    %114 = vector.broadcast %cst_22 : f32 to vector<2x32xf32>
    %115 = arith.mulf %114, %106 : vector<2x32xf32>
    %116 = arith.addf %115, %113 : vector<2x32xf32>
    %117 = vector.extract_strided_slice %112 {offsets = [0, 32], sizes = [2, 32], strides = [1, 1]} : vector<2x64xf32> to vector<2x32xf32>
    %118 = arith.mulf %117, %106 : vector<2x32xf32>
    %cst_23 = arith.constant 5.000000e-01 : f32
    %119 = vector.broadcast %cst_23 : f32 to vector<2x32xf32>
    %120 = arith.mulf %119, %111 : vector<2x32xf32>
    %121 = arith.addf %120, %118 : vector<2x32xf32>
    %122 = tpu.concatenate %51, %61, %71, %81, %91, %101, %111, %121, %116, %121 in 0 : vector<2x32xf32>, vector<2x32xf32>, vector<2x32xf32>, vector<2x32xf32>, vector<2x32xf32>, vector<2x32xf32>, vector<2x32xf32>, vector<2x32xf32>, vector<2x32xf32>, vector<2x32xf32> -> vector<20x32xf32>
    %c0_24 = arith.constant 0 : index
    %c0_25 = arith.constant 0 : index
    %123 = vector.load %arg2[%c0_24, %c0_25] : memref<32x128xf32, #tpu.memory_space<vmem>>, vector<32x128xf32>
    %cst_26 = arith.constant dense<0.000000e+00> : vector<20x128xf32>
    %124 = tpu.matmul %122, %123, %cst_26 {dimension_numbers = #tpu.dot_dimension_numbers<[1], [0], [0], [1], [0, 0, 1, 1], [], []>} : vector<20x32xf32>, vector<32x128xf32>, vector<20x128xf32> -> vector<20x128xf32>
    %c0_27 = arith.constant 0 : index
    %c0_28 = arith.constant 0 : index
    %125 = vector.load %arg3[%c0_27, %c0_28] : memref<20x128xf32, #tpu.memory_space<vmem>>, vector<20x128xf32>
    tpu.vector_store %arg3[%c0_27, %c0_28], %124 {strides = array<i32>} : memref<20x128xf32, #tpu.memory_space<vmem>>, vector<20x128xf32>,
    return
  }
}

</mosaic_0001>

<llo_original>
// kernel: custom-call.2
$region0: #{custom-call.2}
  %s0 = inlined_call_operand.vmem [shape: f32[16,16], index: 0, kind: input, shape index: {}]
  %s1 = inlined_call_operand.vmem [shape: f32[16,16], index: 1, kind: input, shape index: {}]
  %s2 = inlined_call_operand.vmem [shape: f32[16,16], index: 2, kind: input, shape index: {}]
  %s3 = inlined_call_operand.vmem [shape: f32[16,16], index: 3, kind: input, shape index: {}]
  %s4 = inlined_call_operand.vmem [shape: f32[16], index: 4, kind: output, shape index: {0}]
  %s5 = inlined_call_operand.vmem [shape: f32[16], index: 5, kind: output, shape index: {1}]
  %s6 = inlined_call_operand.vmem [shape: f32[16,16], index: 6, kind: output, shape index: {2}]
  %s7 = inlined_call_operand.vmem [shape: f32[16,16], index: 7, kind: output, shape index: {3}]
  %s8 = inlined_call_operand.vmem [shape: f32[16,16], index: 8, kind: output, shape index: {4}]
  %s9 = inlined_call_operand.vmem [shape: f32[16,16], index: 9, kind: output, shape index: {5}]
  %10 = xla_tuple %s4, %s5, %s6, %s7, %s8, %s9
  $region1: #{custom-call.2} parent=0
    #allocation0 [shape = 'u8[8192]{0}', space=vmem, size = 0x2000, scoped, tag = 'operand span for operand 0']
    #allocation1 [shape = 'u8[8192]{0}', space=vmem, size = 0x2000, scoped, tag = 'operand span for operand 1']
    #allocation2 [shape = 'u8[8192]{0}', space=vmem, size = 0x2000, scoped, tag = 'operand span for operand 2']
    #allocation3 [shape = 'u8[8192]{0}', space=vmem, size = 0x2000, scoped, tag = 'operand span for operand 3']
    #allocation4 [shape = 'u8[4096]{0}', space=vmem, size = 0x1000, scoped, tag = 'operand span for operand 4']
    #allocation5 [shape = 'u8[512]{0}', space=vmem, size = 0x400, scoped, tag = 'packed  for operand 4']
    #allocation6 [shape = 'u8[4096]{0}', space=vmem, size = 0x1000, scoped, tag = 'operand span for operand 5']
    #allocation7 [shape = 'u8[512]{0}', space=vmem, size = 0x400, scoped, tag = 'packed  for operand 5']
    #allocation8 [shape = 'u8[8192]{0}', space=vmem, size = 0x2000, scoped, tag = 'operand span for operand 6']
    #allocation9 [shape = 'u8[8192]{0}', space=vmem, size = 0x2000, scoped, tag = 'operand span for operand 7']
    #allocation10 [shape = 'u8[8192]{0}', space=vmem, size = 0x2000, scoped, tag = 'operand span for operand 8']
    #allocation11 [shape = 'u8[8192]{0}', space=vmem, size = 0x2000, scoped, tag = 'operand span for operand 9']
    #allocation12 [shape = 'f32[16,16]{1,0}', space=vmem, size = 0x2000, scoped, tag = 'a top-left matrix']
    #allocation13 [shape = 'f32[16,16]{1,0}', space=vmem, size = 0x2000, scoped, tag = 'a top-right matrix']
    #allocation14 [shape = 'f32[16,16]{1,0}', space=vmem, size = 0x2000, scoped, tag = 'a bottom-left matrix']
    #allocation15 [shape = 'f32[16,16]{1,0}', space=vmem, size = 0x2000, scoped, tag = 'a bottom-right matrix']
    // Predicated region
    $region2: #{custom-call.2} parent=1 // pred_check
      _
    $region3: #{custom-call.2} parent=1 // pred_check_branch
      %12 = sbr.rel (0) target = $region5
    $region4: #{custom-call.2} parent=1 // pred_region
      %p14 = scmp.gt.s32.totalorder 2, 0
      // Predicated region
      $region6: #{custom-call.2} parent=4 // pred_check
        %p15 = pneg %p14
      $region7: #{custom-call.2} parent=4 // pred_check_branch
        %17 = sbr.rel (%p15) target = $region9
      $region8: #{custom-call.2} parent=4 // pred_region
        %s18 = ssub.s32 2, 1
        %s19 = smul.u32 %s18, 8
        %s20 = scalar_lea.vmem %s0, %s19
        %v21 = vld [vmem:[%s0] sm:$0xff]
        // While loop
        $region10: #{custom-call.2} parent=8 // loop_pre_header
          _
        $region11: #{custom-call.2} parent=8 // loop_header
          %s22 = sphi %s0, %s44
          %s23 = sphi [#allocation0], %s45
          %v24 = vphi %v21, %v46
          %s25 = ssub.s32 %s20, 64
          %p26 = scmp.gt.s32.totalorder %s22, %s25
        $region12: #{custom-call.2} parent=8 // loop_header_branch
          %28 = sbr.rel (%p26) target = $region16
        $region13: #{custom-call.2} parent=8 // loop_body
          %29 = vst [vmem:[%s23] sm:$0xff] %v24
          %v30 = vld [vmem:[%s22 + $0x8] sm:$0xff]
          %31 = vst [vmem:[%s23 + $0x8] sm:$0xff] %v30
          %v32 = vld [vmem:[%s22 + $0x10] sm:$0xff]
          %33 = vst [vmem:[%s23 + $0x10] sm:$0xff] %v32
          %v34 = vld [vmem:[%s22 + $0x18] sm:$0xff]
          %35 = vst [vmem:[%s23 + $0x18] sm:$0xff] %v34
          %v36 = vld [vmem:[%s22 + $0x20] sm:$0xff]
          %37 = vst [vmem:[%s23 + $0x20] sm:$0xff] %v36
          %v38 = vld [vmem:[%s22 + $0x28] sm:$0xff]
          %39 = vst [vmem:[%s23 + $0x28] sm:$0xff] %v38
          %v40 = vld [vmem:[%s22 + $0x30] sm:$0xff]
          %41 = vst [vmem:[%s23 + $0x30] sm:$0xff] %v40
          %v42 = vld [vmem:[%s22 + $0x38] sm:$0xff]
          %43 = vst [vmem:[%s23 + $0x38] sm:$0xff] %v42
        $region14: #{custom-call.2} parent=8 // loop_footer
          %s44 = scalar_lea.vmem %s22, 64
          %s45 = scalar_lea.vmem %s23, 64
          %v46 = vld [vmem:[%s22 + $0x40] sm:$0xff]
        $region15: #{custom-call.2} parent=8 // loop_footer_branch
          %47 = sbr.rel target = $region11
        $region16: #{custom-call.2} parent=8 // loop_exit
          _
        // While loop
        $region17: #{custom-call.2} parent=8 // loop_pre_header
          _
        $region18: #{custom-call.2} parent=8 // loop_header
          %s48 = sphi %s22, %s56
          %s49 = sphi %s23, %s57
          %v50 = vphi %v24, %v50
          %p51 = scmp.gt.s32.totalorder %s48, %s20
        $region19: #{custom-call.2} parent=8 // loop_header_branch
          %53 = sbr.rel (%p51) target = $region23
        $region20: #{custom-call.2} parent=8 // loop_body
          %v54 = vld [vmem:[%s48] sm:$0xff]
          %55 = vst [vmem:[%s49] sm:$0xff] %v54
        $region21: #{custom-call.2} parent=8 // loop_footer
          %s56 = scalar_lea.vmem %s48, 8
          %s57 = scalar_lea.vmem %s49, 8
        $region22: #{custom-call.2} parent=8 // loop_footer_branch
          %58 = sbr.rel target = $region18
        $region23: #{custom-call.2} parent=8 // loop_exit
          _
      $region9: #{custom-call.2} parent=4 // pred_fallthru
        _
      %s60 = ssub.s32 1, 1
      %s61 = smul.u32 2, 8
      %s62 = scalar_lea.vmem [#allocation0], %s61
      %s63 = smul.u32 2, 8
      %s64 = scalar_lea.vmem %s0, %s63
      %v65 = vld [vmem:[%s64] sm:%s60]
      %66 = vst [vmem:[%s62] sm:%s60] %v65
    $region5: #{custom-call.2} parent=1 // pred_fallthru
      _
    // Predicated region
    $region24: #{custom-call.2} parent=1 // pred_check
      _
    $region25: #{custom-call.2} parent=1 // pred_check_branch
      %68 = sbr.rel (0) target = $region27
    $region26: #{custom-call.2} parent=1 // pred_region
      %p70 = scmp.gt.s32.totalorder 2, 0
      // Predicated region
      $region28: #{custom-call.2} parent=26 // pred_check
        %p71 = pneg %p70
      $region29: #{custom-call.2} parent=26 // pred_check_branch
        %73 = sbr.rel (%p71) target = $region31
      $region30: #{custom-call.2} parent=26 // pred_region
        %s74 = ssub.s32 2, 1
        %s75 = smul.u32 %s74, 8
        %s76 = scalar_lea.vmem %s1, %s75
        %v77 = vld [vmem:[%s1] sm:$0xff]
        // While loop
        $region32: #{custom-call.2} parent=30 // loop_pre_header
          _
        $region33: #{custom-call.2} parent=30 // loop_header
          %s78 = sphi %s1, %s100
          %s79 = sphi [#allocation1], %s101
          %v80 = vphi %v77, %v102
          %s81 = ssub.s32 %s76, 64
          %p82 = scmp.gt.s32.totalorder %s78, %s81
        $region34: #{custom-call.2} parent=30 // loop_header_branch
          %84 = sbr.rel (%p82) target = $region38
        $region35: #{custom-call.2} parent=30 // loop_body
          %85 = vst [vmem:[%s79] sm:$0xff] %v80
          %v86 = vld [vmem:[%s78 + $0x8] sm:$0xff]
          %87 = vst [vmem:[%s79 + $0x8] sm:$0xff] %v86
          %v88 = vld [vmem:[%s78 + $0x10] sm:$0xff]
          %89 = vst [vmem:[%s79 + $0x10] sm:$0xff] %v88
          %v90 = vld [vmem:[%s78 + $0x18] sm:$0xff]
          %91 = vst [vmem:[%s79 + $0x18] sm:$0xff] %v90
          %v92 = vld [vmem:[%s78 + $0x20] sm:$0xff]
          %93 = vst [vmem:[%s79 + $0x20] sm:$0xff] %v92
          %v94 = vld [vmem:[%s78 + $0x28] sm:$0xff]
          %95 = vst [vmem:[%s79 + $0x28] sm:$0xff] %v94
          %v96 = vld [vmem:[%s78 + $0x30] sm:$0xff]
          %97 = vst [vmem:[%s79 + $0x30] sm:$0xff] %v96
          %v98 = vld [vmem:[%s78 + $0x38] sm:$0xff]
          %99 = vst [vmem:[%s79 + $0x38] sm:$0xff] %v98
        $region36: #{custom-call.2} parent=30 // loop_footer
          %s100 = scalar_lea.vmem %s78, 64
          %s101 = scalar_lea.vmem %s79, 64
          %v102 = vld [vmem:[%s78 + $0x40] sm:$0xff]
        $region37: #{custom-call.2} parent=30 // loop_footer_branch
          %103 = sbr.rel target = $region33
        $region38: #{custom-call.2} parent=30 // loop_exit
          _
        // While loop
        $region39: #{custom-call.2} parent=30 // loop_pre_header
          _
        $region40: #{custom-call.2} parent=30 // loop_header
          %s104 = sphi %s78, %s112
          %s105 = sphi %s79, %s113
          %v106 = vphi %v80, %v106
          %p107 = scmp.gt.s32.totalorder %s104, %s76
        $region41: #{custom-call.2} parent=30 // loop_header_branch
          %109 = sbr.rel (%p107) target = $region45
        $region42: #{custom-call.2} parent=30 // loop_body
          %v110 = vld [vmem:[%s104] sm:$0xff]
          %111 = vst [vmem:[%s105] sm:$0xff] %v110
        $region43: #{custom-call.2} parent=30 // loop_footer
          %s112 = scalar_lea.vmem %s104, 8
          %s113 = scalar_lea.vmem %s105, 8
        $region44: #{custom-call.2} parent=30 // loop_footer_branch
          %114 = sbr.rel target = $region40
        $region45: #{custom-call.2} parent=30 // loop_exit
          _
      $region31: #{custom-call.2} parent=26 // pred_fallthru
        _
      %s116 = ssub.s32 1, 1
      %s117 = smul.u32 2, 8
      %s118 = scalar_lea.vmem [#allocation1], %s117
      %s119 = smul.u32 2, 8
      %s120 = scalar_lea.vmem %s1, %s119
      %v121 = vld [vmem:[%s120] sm:%s116]
      %122 = vst [vmem:[%s118] sm:%s116] %v121
    $region27: #{custom-call.2} parent=1 // pred_fallthru
      _
    // Predicated region
    $region46: #{custom-call.2} parent=1 // pred_check
      _
    $region47: #{custom-call.2} parent=1 // pred_check_branch
      %124 = sbr.rel (0) target = $region49
    $region48: #{custom-call.2} parent=1 // pred_region
      %p126 = scmp.gt.s32.totalorder 2, 0
      // Predicated region
      $region50: #{custom-call.2} parent=48 // pred_check
        %p127 = pneg %p126
      $region51: #{custom-call.2} parent=48 // pred_check_branch
        %129 = sbr.rel (%p127) target = $region53
      $region52: #{custom-call.2} parent=48 // pred_region
        %s130 = ssub.s32 2, 1
        %s131 = smul.u32 %s130, 8
        %s132 = scalar_lea.vmem %s2, %s131
        %v133 = vld [vmem:[%s2] sm:$0xff]
        // While loop
        $region54: #{custom-call.2} parent=52 // loop_pre_header
          _
        $region55: #{custom-call.2} parent=52 // loop_header
          %s134 = sphi %s2, %s156
          %s135 = sphi [#allocation2], %s157
          %v136 = vphi %v133, %v158
          %s137 = ssub.s32 %s132, 64
          %p138 = scmp.gt.s32.totalorder %s134, %s137
        $region56: #{custom-call.2} parent=52 // loop_header_branch
          %140 = sbr.rel (%p138) target = $region60
        $region57: #{custom-call.2} parent=52 // loop_body
          %141 = vst [vmem:[%s135] sm:$0xff] %v136
          %v142 = vld [vmem:[%s134 + $0x8] sm:$0xff]
          %143 = vst [vmem:[%s135 + $0x8] sm:$0xff] %v142
          %v144 = vld [vmem:[%s134 + $0x10] sm:$0xff]
          %145 = vst [vmem:[%s135 + $0x10] sm:$0xff] %v144
          %v146 = vld [vmem:[%s134 + $0x18] sm:$0xff]
          %147 = vst [vmem:[%s135 + $0x18] sm:$0xff] %v146
          %v148 = vld [vmem:[%s134 + $0x20] sm:$0xff]
          %149 = vst [vmem:[%s135 + $0x20] sm:$0xff] %v148
          %v150 = vld [vmem:[%s134 + $0x28] sm:$0xff]
          %151 = vst [vmem:[%s135 + $0x28] sm:$0xff] %v150
          %v152 = vld [vmem:[%s134 + $0x30] sm:$0xff]
          %153 = vst [vmem:[%s135 + $0x30] sm:$0xff] %v152
          %v154 = vld [vmem:[%s134 + $0x38] sm:$0xff]
          %155 = vst [vmem:[%s135 + $0x38] sm:$0xff] %v154
        $region58: #{custom-call.2} parent=52 // loop_footer
          %s156 = scalar_lea.vmem %s134, 64
          %s157 = scalar_lea.vmem %s135, 64
          %v158 = vld [vmem:[%s134 + $0x40] sm:$0xff]
        $region59: #{custom-call.2} parent=52 // loop_footer_branch
          %159 = sbr.rel target = $region55
        $region60: #{custom-call.2} parent=52 // loop_exit
          _
        // While loop
        $region61: #{custom-call.2} parent=52 // loop_pre_header
          _
        $region62: #{custom-call.2} parent=52 // loop_header
          %s160 = sphi %s134, %s168
          %s161 = sphi %s135, %s169
          %v162 = vphi %v136, %v162
          %p163 = scmp.gt.s32.totalorder %s160, %s132
        $region63: #{custom-call.2} parent=52 // loop_header_branch
          %165 = sbr.rel (%p163) target = $region67
        $region64: #{custom-call.2} parent=52 // loop_body
          %v166 = vld [vmem:[%s160] sm:$0xff]
          %167 = vst [vmem:[%s161] sm:$0xff] %v166
        $region65: #{custom-call.2} parent=52 // loop_footer
          %s168 = scalar_lea.vmem %s160, 8
          %s169 = scalar_lea.vmem %s161, 8
        $region66: #{custom-call.2} parent=52 // loop_footer_branch
          %170 = sbr.rel target = $region62
        $region67: #{custom-call.2} parent=52 // loop_exit
          _
      $region53: #{custom-call.2} parent=48 // pred_fallthru
        _
      %s172 = ssub.s32 1, 1
      %s173 = smul.u32 2, 8
      %s174 = scalar_lea.vmem [#allocation2], %s173
      %s175 = smul.u32 2, 8
      %s176 = scalar_lea.vmem %s2, %s175
      %v177 = vld [vmem:[%s176] sm:%s172]
      %178 = vst [vmem:[%s174] sm:%s172] %v177
    $region49: #{custom-call.2} parent=1 // pred_fallthru
      _
    // Predicated region
    $region68: #{custom-call.2} parent=1 // pred_check
      _
    $region69: #{custom-call.2} parent=1 // pred_check_branch
      %180 = sbr.rel (0) target = $region71
    $region70: #{custom-call.2} parent=1 // pred_region
      %p182 = scmp.gt.s32.totalorder 2, 0
      // Predicated region
      $region72: #{custom-call.2} parent=70 // pred_check
        %p183 = pneg %p182
      $region73: #{custom-call.2} parent=70 // pred_check_branch
        %185 = sbr.rel (%p183) target = $region75
      $region74: #{custom-call.2} parent=70 // pred_region
        %s186 = ssub.s32 2, 1
        %s187 = smul.u32 %s186, 8
        %s188 = scalar_lea.vmem %s3, %s187
        %v189 = vld [vmem:[%s3] sm:$0xff]
        // While loop
        $region76: #{custom-call.2} parent=74 // loop_pre_header
          _
        $region77: #{custom-call.2} parent=74 // loop_header
          %s190 = sphi %s3, %s212
          %s191 = sphi [#allocation3], %s213
          %v192 = vphi %v189, %v214
          %s193 = ssub.s32 %s188, 64
          %p194 = scmp.gt.s32.totalorder %s190, %s193
        $region78: #{custom-call.2} parent=74 // loop_header_branch
          %196 = sbr.rel (%p194) target = $region82
        $region79: #{custom-call.2} parent=74 // loop_body
          %197 = vst [vmem:[%s191] sm:$0xff] %v192
          %v198 = vld [vmem:[%s190 + $0x8] sm:$0xff]
          %199 = vst [vmem:[%s191 + $0x8] sm:$0xff] %v198
          %v200 = vld [vmem:[%s190 + $0x10] sm:$0xff]
          %201 = vst [vmem:[%s191 + $0x10] sm:$0xff] %v200
          %v202 = vld [vmem:[%s190 + $0x18] sm:$0xff]
          %203 = vst [vmem:[%s191 + $0x18] sm:$0xff] %v202
          %v204 = vld [vmem:[%s190 + $0x20] sm:$0xff]
          %205 = vst [vmem:[%s191 + $0x20] sm:$0xff] %v204
          %v206 = vld [vmem:[%s190 + $0x28] sm:$0xff]
          %207 = vst [vmem:[%s191 + $0x28] sm:$0xff] %v206
          %v208 = vld [vmem:[%s190 + $0x30] sm:$0xff]
          %209 = vst [vmem:[%s191 + $0x30] sm:$0xff] %v208
          %v210 = vld [vmem:[%s190 + $0x38] sm:$0xff]
          %211 = vst [vmem:[%s191 + $0x38] sm:$0xff] %v210
        $region80: #{custom-call.2} parent=74 // loop_footer
          %s212 = scalar_lea.vmem %s190, 64
          %s213 = scalar_lea.vmem %s191, 64
          %v214 = vld [vmem:[%s190 + $0x40] sm:$0xff]
        $region81: #{custom-call.2} parent=74 // loop_footer_branch
          %215 = sbr.rel target = $region77
        $region82: #{custom-call.2} parent=74 // loop_exit
          _
        // While loop
        $region83: #{custom-call.2} parent=74 // loop_pre_header
          _
        $region84: #{custom-call.2} parent=74 // loop_header
          %s216 = sphi %s190, %s224
          %s217 = sphi %s191, %s225
          %v218 = vphi %v192, %v218
          %p219 = scmp.gt.s32.totalorder %s216, %s188
        $region85: #{custom-call.2} parent=74 // loop_header_branch
          %221 = sbr.rel (%p219) target = $region89
        $region86: #{custom-call.2} parent=74 // loop_body
          %v222 = vld [vmem:[%s216] sm:$0xff]
          %223 = vst [vmem:[%s217] sm:$0xff] %v222
        $region87: #{custom-call.2} parent=74 // loop_footer
          %s224 = scalar_lea.vmem %s216, 8
          %s225 = scalar_lea.vmem %s217, 8
        $region88: #{custom-call.2} parent=74 // loop_footer_branch
          %226 = sbr.rel target = $region84
        $region89: #{custom-call.2} parent=74 // loop_exit
          _
      $region75: #{custom-call.2} parent=70 // pred_fallthru
        _
      %s228 = ssub.s32 1, 1
      %s229 = smul.u32 2, 8
      %s230 = scalar_lea.vmem [#allocation3], %s229
      %s231 = smul.u32 2, 8
      %s232 = scalar_lea.vmem %s3, %s231
      %v233 = vld [vmem:[%s232] sm:%s228]
      %234 = vst [vmem:[%s230] sm:%s228] %v233
    $region71: #{custom-call.2} parent=1 // pred_fallthru
      _
    %s235 = smov [#allocation12]
    %v236 = vld [vmem:[#allocation0] sm:$0xff]
    %237 = vst [vmem:[%s235] sm:$0xff] %v236
    %s238 = scalar_lea.vmem %s235, 8
    %s239 = scalar_lea.vmem [#allocation0], 8
    %v240 = vld [vmem:[%s239] sm:$0xff]
    %241 = vst [vmem:[%s238] sm:$0xff] %v240
    %s242 = smov [#allocation13]
    %v243 = vld [vmem:[#allocation1] sm:$0xff]
    %244 = vst [vmem:[%s242] sm:$0xff] %v243
    %s245 = scalar_lea.vmem %s242, 8
    %s246 = scalar_lea.vmem [#allocation1], 8
    %v247 = vld [vmem:[%s246] sm:$0xff]
    %248 = vst [vmem:[%s245] sm:$0xff] %v247
    %s249 = smov [#allocation14]
    %v250 = vld [vmem:[#allocation2] sm:$0xff]
    %251 = vst [vmem:[%s249] sm:$0xff] %v250
    %s252 = scalar_lea.vmem %s249, 8
    %s253 = scalar_lea.vmem [#allocation2], 8
    %v254 = vld [vmem:[%s253] sm:$0xff]
    %255 = vst [vmem:[%s252] sm:$0xff] %v254
    %s256 = smov [#allocation15]
    %v257 = vld [vmem:[#allocation3] sm:$0xff]
    %258 = vst [vmem:[%s256] sm:$0xff] %v257
    %s259 = scalar_lea.vmem %s256, 8
    %s260 = scalar_lea.vmem [#allocation3], 8
    %v261 = vld [vmem:[%s260] sm:$0xff]
    %262 = vst [vmem:[%s259] sm:$0xff] %v261
    %263 = vst [vmem:[#allocation8] sm:$0xff] 0.0
    %s264 = scalar_lea.vmem [#allocation8], 8
    %265 = vst [vmem:[%s264] sm:$0xff] 0.0
    %266 = vst [vmem:[#allocation9] sm:$0xff] 0.0
    %s267 = scalar_lea.vmem [#allocation9], 8
    %268 = vst [vmem:[%s267] sm:$0xff] 0.0
    %269 = vst [vmem:[#allocation10] sm:$0xff] 0.0
    %s270 = scalar_lea.vmem [#allocation10], 8
    %271 = vst [vmem:[%s270] sm:$0xff] 0.0
    %272 = vst [vmem:[#allocation11] sm:$0xff] 0.0
    %s273 = scalar_lea.vmem [#allocation11], 8
    %274 = vst [vmem:[%s273] sm:$0xff] 0.0
    %s275 = smov [#allocation8]
    %v276 = vlaneseq
    %v277 = vand.u32 %v276, 127
    %v278 = vmov %v277
    %v279 = vlaneseq
    %v280 = vshrl.u32 %v279, 7
    %v281 = vmov %v280
    %v282 = vld [vmem:[%s275] sm:$0xff]
    %vm285 = vcmp.eq.s32.totalorder %v281, %v278
    %v286 = vsel %vm285, 1.0, %v282
    %287 = vst [vmem:[%s275] sm:$0xff] %v286
    %s288 = scalar_lea.vmem %s275, 8
    %v289 = vld [vmem:[%s288] sm:$0xff]
    %v291 = vadd.s32 %v281, 8
    %vm292 = vcmp.eq.s32.totalorder %v291, %v278
    %v293 = vsel %vm292, 1.0, %v289
    %294 = vst [vmem:[%s288] sm:$0xff] %v293
    %s295 = smov [#allocation11]
    %v296 = vlaneseq
    %v297 = vand.u32 %v296, 127
    %v298 = vmov %v297
    %v299 = vlaneseq
    %v300 = vshrl.u32 %v299, 7
    %v301 = vmov %v300
    %v302 = vld [vmem:[%s295] sm:$0xff]
    %vm305 = vcmp.eq.s32.totalorder %v301, %v298
    %v306 = vsel %vm305, 1.0, %v302
    %307 = vst [vmem:[%s295] sm:$0xff] %v306
    %s308 = scalar_lea.vmem %s295, 8
    %v309 = vld [vmem:[%s308] sm:$0xff]
    %v311 = vadd.s32 %v301, 8
    %vm312 = vcmp.eq.s32.totalorder %v311, %v298
    %v313 = vsel %vm312, 1.0, %v309
    %314 = vst [vmem:[%s308] sm:$0xff] %v313
    // While loop
    $region90: #{custom-call.2} parent=1 // loop_pre_header
      _
    $region91: #{custom-call.2} parent=1 // loop_header
      %s316 = sphi 0, %s1254
      %v317 = vlaneseq
      %v318 = vand.u32 %v317, 127
      %v319 = vmov %v318
      %v320 = vlaneseq
      %v321 = vshrl.u32 %v320, 7
      %v322 = vmov %v321
      %s323 = smov [#allocation12]
      %v324 = vlaneseq
      %v325 = vand.u32 %v324, 127
      %vm326 = vcmp.ge.s32.totalorder %v325, 0
      %vm327 = vcmp.lt.s32.totalorder %v325, 16
      %vm328 = vmand %vm326, %vm327
      %v329 = vld [vmem:[%s323] sm:$0xff]
      %v330 = vsel %vm328, %v329, 0.0
      %v331 = vmul.f32 %v330, %v330
      %vm334 = vcmp.eq.s32.totalorder %v322, %v319
      %v335 = vsel %vm334, 0.0, %v331
      %s336 = scalar_lea.vmem %s323, 8
      %v337 = vld [vmem:[%s336] sm:$0xff]
      %v338 = vsel %vm328, %v337, 0.0
      %v339 = vmul.f32 %v338, %v338
      %v341 = vadd.s32 %v322, 8
      %vm342 = vcmp.eq.s32.totalorder %v341, %v319
      %v343 = vsel %vm342, 0.0, %v339
      %v344 = vadd.f32 %v335, %v343
      %v345 = vadd.f32 %v331, %v339
      %v346 = vlaneseq
      %v347 = vand.u32 %v346, 127
      %v348 = vmov %v347
      %v349 = vlaneseq
      %v350 = vshrl.u32 %v349, 7
      %v351 = vmov %v350
      %s352 = smov [#allocation13]
      %v353 = vlaneseq
      %v354 = vand.u32 %v353, 127
      %vm355 = vcmp.ge.s32.totalorder %v354, 0
      %vm356 = vcmp.lt.s32.totalorder %v354, 16
      %vm357 = vmand %vm355, %vm356
      %v358 = vld [vmem:[%s352] sm:$0xff]
      %v359 = vsel %vm357, %v358, 0.0
      %v360 = vmul.f32 %v359, %v359
      %v361 = vadd.f32 %v344, %v360
      %v362 = vadd.f32 %v345, %v360
      %s363 = scalar_lea.vmem %s352, 8
      %v364 = vld [vmem:[%s363] sm:$0xff]
      %v365 = vsel %vm357, %v364, 0.0
      %v366 = vmul.f32 %v365, %v365
      %v367 = vadd.f32 %v361, %v366
      %v368 = vadd.f32 %v362, %v366
      %v369 = vlaneseq
      %v370 = vand.u32 %v369, 127
      %v371 = vmov %v370
      %v372 = vlaneseq
      %v373 = vshrl.u32 %v372, 7
      %v374 = vmov %v373
      %s375 = smov [#allocation14]
      %v376 = vlaneseq
      %v377 = vand.u32 %v376, 127
      %vm378 = vcmp.ge.s32.totalorder %v377, 0
      %vm379 = vcmp.lt.s32.totalorder %v377, 16
      %vm380 = vmand %vm378, %vm379
      %v381 = vld [vmem:[%s375] sm:$0xff]
      %v382 = vsel %vm380, %v381, 0.0
      %v383 = vmul.f32 %v382, %v382
      %v384 = vadd.f32 %v367, %v383
      %v385 = vadd.f32 %v368, %v383
      %s386 = scalar_lea.vmem %s375, 8
      %v387 = vld [vmem:[%s386] sm:$0xff]
      %v388 = vsel %vm380, %v387, 0.0
      %v389 = vmul.f32 %v388, %v388
      %v390 = vadd.f32 %v384, %v389
      %v391 = vadd.f32 %v385, %v389
      %v392 = vlaneseq
      %v393 = vand.u32 %v392, 127
      %v394 = vmov %v393
      %v395 = vlaneseq
      %v396 = vshrl.u32 %v395, 7
      %v397 = vmov %v396
      %s398 = smov [#allocation15]
      %v399 = vlaneseq
      %v400 = vand.u32 %v399, 127
      %vm401 = vcmp.ge.s32.totalorder %v400, 0
      %vm402 = vcmp.lt.s32.totalorder %v400, 16
      %vm403 = vmand %vm401, %vm402
      %v404 = vld [vmem:[%s398] sm:$0xff]
      %v405 = vsel %vm403, %v404, 0.0
      %v406 = vmul.f32 %v405, %v405
      %vm409 = vcmp.eq.s32.totalorder %v397, %v394
      %v410 = vsel %vm409, 0.0, %v406
      %v411 = vadd.f32 %v390, %v410
      %v412 = vadd.f32 %v391, %v406
      %s413 = scalar_lea.vmem %s398, 8
      %v414 = vld [vmem:[%s413] sm:$0xff]
      %v415 = vsel %vm403, %v414, 0.0
      %v416 = vmul.f32 %v415, %v415
      %v418 = vadd.s32 %v397, 8
      %vm419 = vcmp.eq.s32.totalorder %v418, %v394
      %v420 = vsel %vm419, 0.0, %v416
      %v421 = vadd.f32 %v411, %v420
      %v422 = vadd.f32 %v412, %v416
      %423 = vadd.xlane.f32.xlu0 %v422
      %v424 = vpop.xlane.xlu0 %423
      %v425 = vrot.slane %v424, 4
      %v426 = vadd.f32 %v424, %v425
      %v427 = vrot.slane %v426, 2
      %v428 = vadd.f32 %v426, %v427
      %v429 = vrot.slane %v428, 1
      %v430 = vadd.f32 %v428, %v429
      %431 = vadd.xlane.f32.xlu0 %v421
      %v432 = vpop.xlane.xlu0 %431
      %v433 = vrot.slane %v432, 4
      %v434 = vadd.f32 %v432, %v433
      %v435 = vrot.slane %v434, 2
      %v436 = vadd.f32 %v434, %v435
      %v437 = vrot.slane %v436, 1
      %v438 = vadd.f32 %v436, %v437
      %s439 = vtos %v438
      %s440 = vtos %v430
      %s441 = smul.f32 1e-10, %s440
      %p442 = scmp.le.f32.partialorder %s439, %s441
      %p443 = scmp.ge.s32.totalorder %s316, 15
      %p444 = por %p442, %p443
    $region92: #{custom-call.2} parent=1 // loop_header_branch
      %1256 = sbr.rel (%p444) target = $region96
    $region93: #{custom-call.2} parent=1 // loop_body
      loop: start=0, step=1, limit=31
      $region97: #{custom-call.2} parent=93 // loop_pre_header
        _
      $region98: #{custom-call.2} parent=93 // loop_header
        %s446 = sphi 0, %s450
        %p447 = scmp.ge.s32.totalorder %s446, 31
      $region99: #{custom-call.2} parent=93 // loop_header_branch
        %449 = sbr.rel (%p447) target = $region103
      $region100: #{custom-call.2} parent=93 // loop_body
        #allocation16 [shape = 'f32[1024]{0}', space=vmem, size = 0x1000, scoped, tag = 'a_tl_diag vmem']
        #allocation17 [shape = 'f32[1024]{0}', space=vmem, size = 0x1000, scoped, tag = 'a_tr_diag vmem']
        #allocation18 [shape = 'f32[1024]{0}', space=vmem, size = 0x1000, scoped, tag = 'a_br_diag vmem']
        #allocation19 [shape = 'f32[1024]{0}', space=vmem, size = 0x1000, scoped, tag = 'rt1 vmem']
        #allocation20 [shape = 'f32[1024]{0}', space=vmem, size = 0x1000, scoped, tag = 'rt2 vmem']
        #allocation21 [shape = 'f32[1024]{0}', space=vmem, size = 0x1000, scoped, tag = 'c vmem']
        #allocation22 [shape = 'f32[1024]{0}', space=vmem, size = 0x1000, scoped, tag = 's vmem']
        #allocation23 [shape = 'f32[8192]{0}', space=vmem, size = 0x8000, scoped, tag = 'c broadcast']
        #allocation24 [shape = 'f32[8192]{0}', space=vmem, size = 0x8000, scoped, tag = 's broadcast']
        %s451 = smov [#allocation12]
        %s452 = smov [#allocation16]
        %v453 = vlaneseq
        %v454 = vand.u32 %v453, 127
        %v455 = vmov %v454
        %v456 = vlaneseq
        %v457 = vshrl.u32 %v456, 7
        %v458 = vmov %v457
        %v459 = vld [vmem:[%s451] sm:$0xff]
        %vm462 = vcmp.eq.s32.totalorder %v458, %v455
        %v463 = vsel %vm462, %v459, 0.0
        %s464 = scalar_lea.vmem %s451, 8
        %v465 = vld [vmem:[%s464] sm:$0xff]
        %v467 = vadd.s32 %v458, 8
        %vm468 = vcmp.eq.s32.totalorder %v467, %v455
        %v469 = vsel %vm468, %v465, %v463
        %v470 = vrot.slane %v469, 4
        %v471 = vadd.f32 %v469, %v470
        %v472 = vrot.slane %v471, 2
        %v473 = vadd.f32 %v471, %v472
        %v474 = vrot.slane %v473, 1
        %v475 = vadd.f32 %v473, %v474
        %476 = vst [vmem:[%s452] sm:$0x1] %v475
        %s477 = smov [#allocation13]
        %s478 = smov [#allocation17]
        %v479 = vlaneseq
        %v480 = vand.u32 %v479, 127
        %v481 = vmov %v480
        %v482 = vlaneseq
        %v483 = vshrl.u32 %v482, 7
        %v484 = vmov %v483
        %v485 = vld [vmem:[%s477] sm:$0xff]
        %vm488 = vcmp.eq.s32.totalorder %v484, %v481
        %v489 = vsel %vm488, %v485, 0.0
        %s490 = scalar_lea.vmem %s477, 8
        %v491 = vld [vmem:[%s490] sm:$0xff]
        %v493 = vadd.s32 %v484, 8
        %vm494 = vcmp.eq.s32.totalorder %v493, %v481
        %v495 = vsel %vm494, %v491, %v489
        %v496 = vrot.slane %v495, 4
        %v497 = vadd.f32 %v495, %v496
        %v498 = vrot.slane %v497, 2
        %v499 = vadd.f32 %v497, %v498
        %v500 = vrot.slane %v499, 1
        %v501 = vadd.f32 %v499, %v500
        %502 = vst [vmem:[%s478] sm:$0x1] %v501
        %s503 = smov [#allocation15]
        %s504 = smov [#allocation18]
        %v505 = vlaneseq
        %v506 = vand.u32 %v505, 127
        %v507 = vmov %v506
        %v508 = vlaneseq
        %v509 = vshrl.u32 %v508, 7
        %v510 = vmov %v509
        %v511 = vld [vmem:[%s503] sm:$0xff]
        %vm514 = vcmp.eq.s32.totalorder %v510, %v507
        %v515 = vsel %vm514, %v511, 0.0
        %s516 = scalar_lea.vmem %s503, 8
        %v517 = vld [vmem:[%s516] sm:$0xff]
        %v519 = vadd.s32 %v510, 8
        %vm520 = vcmp.eq.s32.totalorder %v519, %v507
        %v521 = vsel %vm520, %v517, %v515
        %v522 = vrot.slane %v521, 4
        %v523 = vadd.f32 %v521, %v522
        %v524 = vrot.slane %v523, 2
        %v525 = vadd.f32 %v523, %v524
        %v526 = vrot.slane %v525, 1
        %v527 = vadd.f32 %v525, %v526
        %528 = vst [vmem:[%s504] sm:$0x1] %v527
        %s529 = smov [#allocation21]
        %s530 = smov [#allocation22]
        %s531 = smov [#allocation16]
        %v532 = vld [vmem:[%s531] sm:$0xff]
        %s533 = smov [#allocation17]
        %v534 = vld [vmem:[%s533] sm:$0xff]
        %s535 = smov [#allocation18]
        %v536 = vld [vmem:[%s535] sm:$0xff]
        %v537 = vsub.f32 %v536, %v532
        %v538 = vmul.f32 2.0, %v534
        %v539 = vrcp.pop %v538
        %v540 = vmul.f32 %v538, %v539
        %v541 = vsub.f32 1.0, %v540
        %v542 = vmul.f32 %v539, %v541
        %v543 = vadd.f32 %v539, %v542
        %vm544 = vweird.f32 %v538
        %vm545 = vweird.f32 %v539
        %vm546 = vmor %vm544, %vm545
        %v547 = vsel %vm546, %v539, %v543
        %v548 = vand.u32 2147483647, %v538
        %vm549 = vcmp.eq.f32.partialorder %v548, 8.507059e+37
        %v550 = vand.u32 %v538, 2147483648
        %v551 = vor.u32 1.1754944e-38, %v550
        %v552 = vsel %vm549, %v551, %v547
        %v553 = vmul.f32 %v537, %v552
        %vm554 = vcmp.ge.f32.partialorder %v553, 0.0
        %v555 = vmul.f32 %v553, %v553
        %v556 = vadd.f32 1.0, %v555
        %v557 = vrsqrt.pop %v556
        %v558 = vmul.f32 %v557, %v556
        %v559 = vmul.f32 %v558, %v557
        %v560 = vmul.f32 0.5, %v559
        %v561 = vsub.f32 1.5, %v560
        %v562 = vmul.f32 %v557, %v561
        %v563 = vmul.f32 %v556, %v562
        %vm564 = vcmp.eq.f32.partialorder %v556, inf
        %v565 = vsel %vm564, %v556, %v563
        %vm566 = vcmp.eq.f32.partialorder %v556, 0.0
        %v567 = vand.u32 %v556, 2147483648
        %v568 = vsel %vm566, %v567, %v565
        %v569 = vxor.u32 %v568, 2147483648
        %v570 = vsel %vm554, %v568, %v569
        %v571 = vadd.f32 %v553, %v570
        %v572 = vrcp.pop %v571
        %v573 = vmul.f32 %v571, %v572
        %v574 = vsub.f32 1.0, %v573
        %v575 = vmul.f32 %v572, %v574
        %v576 = vadd.f32 %v572, %v575
        %vm577 = vweird.f32 %v571
        %vm578 = vweird.f32 %v572
        %vm579 = vmor %vm577, %vm578
        %v580 = vsel %vm579, %v572, %v576
        %v581 = vand.u32 2147483647, %v571
        %vm582 = vcmp.eq.f32.partialorder %v581, 8.507059e+37
        %v583 = vand.u32 %v571, 2147483648
        %v584 = vor.u32 1.1754944e-38, %v583
        %v585 = vsel %vm582, %v584, %v580
        %v586 = vand.u32 2147483647, %v532
        %v587 = vand.u32 2147483647, %v534
        %v588 = vand.u32 2147483647, %v536
        %v589 = vmin.f32 %v586, %v588
        %v590 = vmul.f32 1.1920929e-08, %v589
        %vm591 = vcmp.le.f32.partialorder %v587, %v590
        %v592 = vsel %vm591, 0.0, %v585
        %v593 = vmul.f32 %v592, %v592
        %v594 = vadd.f32 1.0, %v593
        %v595 = vrsqrt.pop %v594
        %v596 = vmul.f32 %v595, %v594
        %v597 = vmul.f32 %v596, %v595
        %v598 = vmul.f32 0.5, %v597
        %v599 = vsub.f32 1.5, %v598
        %v600 = vmul.f32 %v595, %v599
        %vm601 = vweird.f32 %v594
        %vm602 = vweird.f32 %v595
        %vm603 = vmor %vm601, %vm602
        %v604 = vsel %vm603, %v595, %v600
        %v605 = vmul.f32 %v592, %v604
        %v606 = vmul.f32 %v592, %v534
        %v607 = vsub.f32 %v532, %v606
        %v608 = vmul.f32 %v592, %v534
        %v609 = vadd.f32 %v536, %v608
        %s610 = smov [#allocation19]
        %611 = vst [vmem:[%s610] sm:$0xff] %v607
        %s612 = smov [#allocation20]
        %613 = vst [vmem:[%s612] sm:$0xff] %v609
        %s614 = smov %s529
        %615 = vst [vmem:[%s614] sm:$0xff] %v604
        %s616 = smov %s530
        %617 = vst [vmem:[%s616] sm:$0xff] %v605
        %s618 = smov [#allocation21]
        %v619 = vld [vmem:[%s618] ss:$0 sm:$0xff]
        %v620 = vlaneseq
        %v621 = vand.u32 %v620, 127
        %v622 = vmov %v621
        %v623 = vlaneseq
        %v624 = vshrl.u32 %v623, 7
        %v625 = vmov %v624
        %vm627 = vcmp.eq.s32.totalorder %v625, %v622
        %v628 = vsel %vm627, %v619, 0.0
        %629 = vadd.xlane.f32.xlu0 %v628
        %v630 = vpop.xlane.xlu0 %629
        %s631 = smov [#allocation23]
        %632 = vst [vmem:[%s631] sm:$0xff] %v630
        %s633 = smov [#allocation21]
        %v634 = vld [vmem:[%s633] ss:$0 sm:$0xff]
        %v635 = vlaneseq
        %v636 = vand.u32 %v635, 127
        %v637 = vmov %v636
        %v638 = vlaneseq
        %v639 = vshrl.u32 %v638, 7
        %v640 = vmov %v639
        %v641 = vadd.s32 %v640, 8
        %vm642 = vcmp.eq.s32.totalorder %v641, %v637
        %v643 = vsel %vm642, %v634, 0.0
        %644 = vadd.xlane.f32.xlu0 %v643
        %v645 = vpop.xlane.xlu0 %644
        %s646 = smov [#allocation23]
        %s647 = scalar_lea.vmem %s646, 8
        %648 = vst [vmem:[%s647] sm:$0xff] %v645
        %s649 = smov [#allocation22]
        %v650 = vld [vmem:[%s649] ss:$0 sm:$0xff]
        %v651 = vlaneseq
        %v652 = vand.u32 %v651, 127
        %v653 = vmov %v652
        %v654 = vlaneseq
        %v655 = vshrl.u32 %v654, 7
        %v656 = vmov %v655
        %vm658 = vcmp.eq.s32.totalorder %v656, %v653
        %v659 = vsel %vm658, %v650, 0.0
        %660 = vadd.xlane.f32.xlu0 %v659
        %v661 = vpop.xlane.xlu0 %660
        %s662 = smov [#allocation24]
        %663 = vst [vmem:[%s662] sm:$0xff] %v661
        %s664 = smov [#allocation22]
        %v665 = vld [vmem:[%s664] ss:$0 sm:$0xff]
        %v666 = vlaneseq
        %v667 = vand.u32 %v666, 127
        %v668 = vmov %v667
        %v669 = vlaneseq
        %v670 = vshrl.u32 %v669, 7
        %v671 = vmov %v670
        %v672 = vadd.s32 %v671, 8
        %vm673 = vcmp.eq.s32.totalorder %v672, %v668
        %v674 = vsel %vm673, %v665, 0.0
        %675 = vadd.xlane.f32.xlu0 %v674
        %v676 = vpop.xlane.xlu0 %675
        %s677 = smov [#allocation24]
        %s678 = scalar_lea.vmem %s677, 8
        %679 = vst [vmem:[%s678] sm:$0xff] %v676
        %s680 = smov [#allocation23]
        %v681 = vld [vmem:[%s680] sm:$0xff]
        %s682 = smov [#allocation24]
        %v683 = vld [vmem:[%s682] sm:$0xff]
        %s684 = smov [#allocation12]
        %s685 = smov [#allocation13]
        %s686 = smov [#allocation14]
        %s687 = smov [#allocation15]
        %v688 = vld [vmem:[%s684] sm:$0xff]
        %v689 = vld [vmem:[%s685] sm:$0xff]
        %v690 = vld [vmem:[%s686] sm:$0xff]
        %v691 = vld [vmem:[%s687] sm:$0xff]
        %v692 = vmul.f32 %v681, %v688
        %v693 = vmul.f32 %v683, %v690
        %v694 = vsub.f32 %v692, %v693
        %v695 = vmul.f32 %v681, %v689
        %v696 = vmul.f32 %v683, %v691
        %v697 = vsub.f32 %v695, %v696
        %v698 = vmul.f32 %v683, %v688
        %v699 = vmul.f32 %v681, %v690
        %v700 = vadd.f32 %v698, %v699
        %v701 = vmul.f32 %v683, %v689
        %v702 = vmul.f32 %v681, %v691
        %v703 = vadd.f32 %v701, %v702
        %704 = vst [vmem:[%s684] sm:$0xff] %v694
        %705 = vst [vmem:[%s685] sm:$0xff] %v697
        %706 = vst [vmem:[%s686] sm:$0xff] %v700
        %707 = vst [vmem:[%s687] sm:$0xff] %v703
        %s708 = smov [#allocation23]
        %s709 = scalar_lea.vmem %s708, 8
        %v710 = vld [vmem:[%s709] sm:$0xff]
        %s711 = smov [#allocation24]
        %s712 = scalar_lea.vmem %s711, 8
        %v713 = vld [vmem:[%s712] sm:$0xff]
        %s714 = smov [#allocation12]
        %s715 = scalar_lea.vmem %s714, 8
        %s716 = smov [#allocation13]
        %s717 = scalar_lea.vmem %s716, 8
        %s718 = smov [#allocation14]
        %s719 = scalar_lea.vmem %s718, 8
        %s720 = smov [#allocation15]
        %s721 = scalar_lea.vmem %s720, 8
        %v722 = vld [vmem:[%s715] sm:$0xff]
        %v723 = vld [vmem:[%s717] sm:$0xff]
        %v724 = vld [vmem:[%s719] sm:$0xff]
        %v725 = vld [vmem:[%s721] sm:$0xff]
        %v726 = vmul.f32 %v710, %v722
        %v727 = vmul.f32 %v713, %v724
        %v728 = vsub.f32 %v726, %v727
        %v729 = vmul.f32 %v710, %v723
        %v730 = vmul.f32 %v713, %v725
        %v731 = vsub.f32 %v729, %v730
        %v732 = vmul.f32 %v713, %v722
        %v733 = vmul.f32 %v710, %v724
        %v734 = vadd.f32 %v732, %v733
        %v735 = vmul.f32 %v713, %v723
        %v736 = vmul.f32 %v710, %v725
        %v737 = vadd.f32 %v735, %v736
        %738 = vst [vmem:[%s715] sm:$0xff] %v728
        %739 = vst [vmem:[%s717] sm:$0xff] %v731
        %740 = vst [vmem:[%s719] sm:$0xff] %v734
        %741 = vst [vmem:[%s721] sm:$0xff] %v737
        %s742 = smov [#allocation21]
        %v743 = vld [vmem:[%s742] ss:$0 sm:$0xff]
        %s744 = smov [#allocation22]
        %v745 = vld [vmem:[%s744] ss:$0 sm:$0xff]
        %s746 = smov [#allocation12]
        %s747 = smov [#allocation13]
        %s748 = smov [#allocation14]
        %s749 = smov [#allocation15]
        %v750 = vld [vmem:[%s746] sm:$0xff]
        %v751 = vld [vmem:[%s747] sm:$0xff]
        %v752 = vld [vmem:[%s748] sm:$0xff]
        %v753 = vld [vmem:[%s749] sm:$0xff]
        %v754 = vmul.f32 %v743, %v750
        %v755 = vmul.f32 %v745, %v751
        %v756 = vsub.f32 %v754, %v755
        %v757 = vmul.f32 %v745, %v750
        %v758 = vmul.f32 %v743, %v751
        %v759 = vadd.f32 %v757, %v758
        %v760 = vmul.f32 %v743, %v752
        %v761 = vmul.f32 %v745, %v753
        %v762 = vsub.f32 %v760, %v761
        %v763 = vmul.f32 %v745, %v752
        %v764 = vmul.f32 %v743, %v753
        %v765 = vadd.f32 %v763, %v764
        %766 = vst [vmem:[%s746] sm:$0xff] %v756
        %767 = vst [vmem:[%s747] sm:$0xff] %v759
        %768 = vst [vmem:[%s748] sm:$0xff] %v762
        %769 = vst [vmem:[%s749] sm:$0xff] %v765
        %s770 = smov [#allocation12]
        %s771 = scalar_lea.vmem %s770, 8
        %s772 = smov [#allocation13]
        %s773 = scalar_lea.vmem %s772, 8
        %s774 = smov [#allocation14]
        %s775 = scalar_lea.vmem %s774, 8
        %s776 = smov [#allocation15]
        %s777 = scalar_lea.vmem %s776, 8
        %v778 = vld [vmem:[%s771] sm:$0xff]
        %v779 = vld [vmem:[%s773] sm:$0xff]
        %v780 = vld [vmem:[%s775] sm:$0xff]
        %v781 = vld [vmem:[%s777] sm:$0xff]
        %v782 = vmul.f32 %v743, %v778
        %v783 = vmul.f32 %v745, %v779
        %v784 = vsub.f32 %v782, %v783
        %v785 = vmul.f32 %v745, %v778
        %v786 = vmul.f32 %v743, %v779
        %v787 = vadd.f32 %v785, %v786
        %v788 = vmul.f32 %v743, %v780
        %v789 = vmul.f32 %v745, %v781
        %v790 = vsub.f32 %v788, %v789
        %v791 = vmul.f32 %v745, %v780
        %v792 = vmul.f32 %v743, %v781
        %v793 = vadd.f32 %v791, %v792
        %794 = vst [vmem:[%s771] sm:$0xff] %v784
        %795 = vst [vmem:[%s773] sm:$0xff] %v787
        %796 = vst [vmem:[%s775] sm:$0xff] %v790
        %797 = vst [vmem:[%s777] sm:$0xff] %v793
        %s798 = smov [#allocation12]
        %s799 = smov [#allocation19]
        %v800 = vlaneseq
        %v801 = vand.u32 %v800, 127
        %v802 = vmov %v801
        %v803 = vlaneseq
        %v804 = vshrl.u32 %v803, 7
        %v805 = vmov %v804
        %v806 = vld [vmem:[%s799] ss:$0 sm:$0xff]
        %v807 = vld [vmem:[%s798] sm:$0xff]
        %vm810 = vcmp.eq.s32.totalorder %v805, %v802
        %v811 = vsel %vm810, %v806, %v807
        %812 = vst [vmem:[%s798] sm:$0xff] %v811
        %v813 = vld [vmem:[%s799] ss:$0 sm:$0xff]
        %s814 = scalar_lea.vmem %s798, 8
        %v815 = vld [vmem:[%s814] sm:$0xff]
        %v817 = vadd.s32 %v805, 8
        %vm818 = vcmp.eq.s32.totalorder %v817, %v802
        %v819 = vsel %vm818, %v813, %v815
        %820 = vst [vmem:[%s814] sm:$0xff] %v819
        %s821 = smov [#allocation13]
        %v822 = vlaneseq
        %v823 = vand.u32 %v822, 127
        %v824 = vmov %v823
        %v825 = vlaneseq
        %v826 = vshrl.u32 %v825, 7
        %v827 = vmov %v826
        %v828 = vld [vmem:[%s821] sm:$0xff]
        %vm831 = vcmp.eq.s32.totalorder %v827, %v824
        %v832 = vsel %vm831, 0.0, %v828
        %833 = vst [vmem:[%s821] sm:$0xff] %v832
        %s834 = scalar_lea.vmem %s821, 8
        %v835 = vld [vmem:[%s834] sm:$0xff]
        %v837 = vadd.s32 %v827, 8
        %vm838 = vcmp.eq.s32.totalorder %v837, %v824
        %v839 = vsel %vm838, 0.0, %v835
        %840 = vst [vmem:[%s834] sm:$0xff] %v839
        %s841 = smov [#allocation14]
        %v842 = vlaneseq
        %v843 = vand.u32 %v842, 127
        %v844 = vmov %v843
        %v845 = vlaneseq
        %v846 = vshrl.u32 %v845, 7
        %v847 = vmov %v846
        %v848 = vld [vmem:[%s841] sm:$0xff]
        %vm851 = vcmp.eq.s32.totalorder %v847, %v844
        %v852 = vsel %vm851, 0.0, %v848
        %853 = vst [vmem:[%s841] sm:$0xff] %v852
        %s854 = scalar_lea.vmem %s841, 8
        %v855 = vld [vmem:[%s854] sm:$0xff]
        %v857 = vadd.s32 %v847, 8
        %vm858 = vcmp.eq.s32.totalorder %v857, %v844
        %v859 = vsel %vm858, 0.0, %v855
        %860 = vst [vmem:[%s854] sm:$0xff] %v859
        %s861 = smov [#allocation15]
        %s862 = smov [#allocation20]
        %v863 = vlaneseq
        %v864 = vand.u32 %v863, 127
        %v865 = vmov %v864
        %v866 = vlaneseq
        %v867 = vshrl.u32 %v866, 7
        %v868 = vmov %v867
        %v869 = vld [vmem:[%s862] ss:$0 sm:$0xff]
        %v870 = vld [vmem:[%s861] sm:$0xff]
        %vm873 = vcmp.eq.s32.totalorder %v868, %v865
        %v874 = vsel %vm873, %v869, %v870
        %875 = vst [vmem:[%s861] sm:$0xff] %v874
        %v876 = vld [vmem:[%s862] ss:$0 sm:$0xff]
        %s877 = scalar_lea.vmem %s861, 8
        %v878 = vld [vmem:[%s877] sm:$0xff]
        %v880 = vadd.s32 %v868, 8
        %vm881 = vcmp.eq.s32.totalorder %v880, %v865
        %v882 = vsel %vm881, %v876, %v878
        %883 = vst [vmem:[%s877] sm:$0xff] %v882
        %s884 = smov [#allocation12]
        %s885 = smov [#allocation13]
        %v886 = vld [vmem:[%s885] sm:$0xff]
        %887 = vrot.lane.b32.xlu0 %v886, 1
        %v888 = vpop.permute.xlu0 %887
        %v889 = vld [vmem:[%s884] sm:$0xff]
        %v890 = vld [vmem:[%s884] sm:$0xff]
        %891 = vrot.lane.b32.xlu0 %v890, 1
        %v892 = vpop.permute.xlu0 %891
        %v893 = vlaneseq
        %v894 = vand.u32 %v893, 127
        %vm895 = vcmp.eq.s32.totalorder %v894, 0
        %v896 = vsel %vm895, %v890, %v892
        %v897 = vlaneseq
        %v898 = vand.u32 %v897, 127
        %vm899 = vcmp.eq.s32.totalorder %v898, 1
        %v900 = vsel %vm899, %v888, %v896
        %v901 = vlaneseq
        %v902 = vand.u32 %v901, 127
        %vm903 = vcmp.ge.s32.totalorder %v902, 0
        %vm904 = vcmp.lt.s32.totalorder %v902, 16
        %vm905 = vmand %vm903, %vm904
        %v906 = vsel %vm905, %v900, 0.0
        %v907 = vld [vmem:[%s885] sm:$0xff]
        %908 = vrot.lane.b32.xlu0 %v907, 127
        %v909 = vpop.permute.xlu0 %908
        %v910 = vlaneseq
        %v911 = vand.u32 %v910, 127
        %vm912 = vcmp.eq.s32.totalorder %v911, 15
        %v913 = vsel %vm912, %v889, %v909
        %s914 = smov [#allocation12]
        %s915 = scalar_lea.vmem %s914, 8
        %s916 = smov [#allocation13]
        %s917 = scalar_lea.vmem %s916, 8
        %v918 = vld [vmem:[%s917] sm:$0xff]
        %919 = vrot.lane.b32.xlu0 %v918, 1
        %v920 = vpop.permute.xlu0 %919
        %v921 = vld [vmem:[%s915] sm:$0xff]
        %v922 = vld [vmem:[%s915] sm:$0xff]
        %923 = vrot.lane.b32.xlu0 %v922, 1
        %v924 = vpop.permute.xlu0 %923
        %v925 = vlaneseq
        %v926 = vand.u32 %v925, 127
        %vm927 = vcmp.eq.s32.totalorder %v926, 0
        %v928 = vsel %vm927, %v922, %v924
        %v929 = vlaneseq
        %v930 = vand.u32 %v929, 127
        %vm931 = vcmp.eq.s32.totalorder %v930, 1
        %v932 = vsel %vm931, %v920, %v928
        %v933 = vlaneseq
        %v934 = vand.u32 %v933, 127
        %vm935 = vcmp.ge.s32.totalorder %v934, 0
        %vm936 = vcmp.lt.s32.totalorder %v934, 16
        %vm937 = vmand %vm935, %vm936
        %v938 = vsel %vm937, %v932, 0.0
        %v939 = vld [vmem:[%s917] sm:$0xff]
        %940 = vrot.lane.b32.xlu0 %v939, 127
        %v941 = vpop.permute.xlu0 %940
        %v942 = vlaneseq
        %v943 = vand.u32 %v942, 127
        %vm944 = vcmp.eq.s32.totalorder %v943, 15
        %v945 = vsel %vm944, %v921, %v941
        %946 = vst [vmem:[%s884] sm:$0xff] %v906
        %947 = vst [vmem:[%s885] sm:$0xff] %v913
        %948 = vst [vmem:[%s915] sm:$0xff] %v938
        %949 = vst [vmem:[%s917] sm:$0xff] %v945
        %s950 = smov [#allocation14]
        %s951 = smov [#allocation15]
        %v952 = vld [vmem:[%s951] sm:$0xff]
        %953 = vrot.lane.b32.xlu0 %v952, 1
        %v954 = vpop.permute.xlu0 %953
        %v955 = vld [vmem:[%s950] sm:$0xff]
        %v956 = vld [vmem:[%s950] sm:$0xff]
        %957 = vrot.lane.b32.xlu0 %v956, 1
        %v958 = vpop.permute.xlu0 %957
        %v959 = vlaneseq
        %v960 = vand.u32 %v959, 127
        %vm961 = vcmp.eq.s32.totalorder %v960, 0
        %v962 = vsel %vm961, %v956, %v958
        %v963 = vlaneseq
        %v964 = vand.u32 %v963, 127
        %vm965 = vcmp.eq.s32.totalorder %v964, 1
        %v966 = vsel %vm965, %v954, %v962
        %v967 = vlaneseq
        %v968 = vand.u32 %v967, 127
        %vm969 = vcmp.ge.s32.totalorder %v968, 0
        %vm970 = vcmp.lt.s32.totalorder %v968, 16
        %vm971 = vmand %vm969, %vm970
        %v972 = vsel %vm971, %v966, 0.0
        %v973 = vld [vmem:[%s951] sm:$0xff]
        %974 = vrot.lane.b32.xlu0 %v973, 127
        %v975 = vpop.permute.xlu0 %974
        %v976 = vlaneseq
        %v977 = vand.u32 %v976, 127
        %vm978 = vcmp.eq.s32.totalorder %v977, 15
        %v979 = vsel %vm978, %v955, %v975
        %s980 = smov [#allocation14]
        %s981 = scalar_lea.vmem %s980, 8
        %s982 = smov [#allocation15]
        %s983 = scalar_lea.vmem %s982, 8
        %v984 = vld [vmem:[%s983] sm:$0xff]
        %985 = vrot.lane.b32.xlu0 %v984, 1
        %v986 = vpop.permute.xlu0 %985
        %v987 = vld [vmem:[%s981] sm:$0xff]
        %v988 = vld [vmem:[%s981] sm:$0xff]
        %989 = vrot.lane.b32.xlu0 %v988, 1
        %v990 = vpop.permute.xlu0 %989
        %v991 = vlaneseq
        %v992 = vand.u32 %v991, 127
        %vm993 = vcmp.eq.s32.totalorder %v992, 0
        %v994 = vsel %vm993, %v988, %v990
        %v995 = vlaneseq
        %v996 = vand.u32 %v995, 127
        %vm997 = vcmp.eq.s32.totalorder %v996, 1
        %v998 = vsel %vm997, %v986, %v994
        %v999 = vlaneseq
        %v1000 = vand.u32 %v999, 127
        %vm1001 = vcmp.ge.s32.totalorder %v1000, 0
        %vm1002 = vcmp.lt.s32.totalorder %v1000, 16
        %vm1003 = vmand %vm1001, %vm1002
        %v1004 = vsel %vm1003, %v998, 0.0
        %v1005 = vld [vmem:[%s983] sm:$0xff]
        %1006 = vrot.lane.b32.xlu0 %v1005, 127
        %v1007 = vpop.permute.xlu0 %1006
        %v1008 = vlaneseq
        %v1009 = vand.u32 %v1008, 127
        %vm1010 = vcmp.eq.s32.totalorder %v1009, 15
        %v1011 = vsel %vm1010, %v987, %v1007
        %1012 = vst [vmem:[%s950] sm:$0xff] %v972
        %1013 = vst [vmem:[%s951] sm:$0xff] %v979
        %1014 = vst [vmem:[%s981] sm:$0xff] %v1004
        %1015 = vst [vmem:[%s983] sm:$0xff] %v1011
        %s1016 = smov [#allocation12]
        %s1017 = smov [#allocation14]
        %v1018 = vld [vmem:[%s1016] ss:$0 sm:$0xff]
        %s1020 = scalar_lea.vmem %s1016, 4294967295
        %v1021 = vld [vmem:[%s1020] sm:$0xfe]
        %v1022 = vlaneseq
        %v1023 = vshrl.u32 %v1022, 7
        %vm1024 = vcmp.eq.s32.totalorder %v1023, 0
        %v1025 = vsel %vm1024, %v1018, %v1021
        %s1026 = scalar_lea.vmem %s1016, 7
        %v1027 = vld [vmem:[%s1026] ss:$0 sm:$0xff]
        %1028 = vst [vmem:[%s1016] sm:$0xff] %v1025
        %s1029 = scalar_lea.vmem %s1016, 8
        %s1031 = scalar_lea.vmem %s1029, 4294967295
        %v1032 = vld [vmem:[%s1031] sm:$0xfe]
        %v1033 = vlaneseq
        %v1034 = vshrl.u32 %v1033, 7
        %vm1035 = vcmp.eq.s32.totalorder %v1034, 0
        %v1036 = vsel %vm1035, %v1027, %v1032
        %s1037 = scalar_lea.vmem %s1029, 7
        %v1038 = vld [vmem:[%s1037] ss:$0 sm:$0xff]
        %1039 = vst [vmem:[%s1029] sm:$0xff] %v1036
        %v1040 = vld [vmem:[%s1017] ss:$0 sm:$0xff]
        %s1041 = scalar_lea.vmem %s1016, 1
        %1042 = vst [vmem:[%s1041] sm:$0x1] %v1040
        %s1043 = scalar_lea.vmem %s1017, 8
        %s1044 = scalar_lea.vmem %s1043, 1
        %v1045 = vld [vmem:[%s1044] sm:$0x7f]
        %v1046 = vlaneseq
        %v1047 = vshrl.u32 %v1046, 7
        %vm1048 = vcmp.eq.s32.totalorder %v1047, 7
        %v1049 = vsel %vm1048, %v1038, %v1045
        %v1050 = vld [vmem:[%s1043] ss:$0 sm:$0xff]
        %1051 = vst [vmem:[%s1043] sm:$0xff] %v1049
        %s1052 = scalar_lea.vmem %s1017, 1
        %v1053 = vld [vmem:[%s1052] sm:$0x7f]
        %v1054 = vlaneseq
        %v1055 = vshrl.u32 %v1054, 7
        %vm1056 = vcmp.eq.s32.totalorder %v1055, 7
        %v1057 = vsel %vm1056, %v1050, %v1053
        %v1058 = vld [vmem:[%s1017] ss:$0 sm:$0xff]
        %1059 = vst [vmem:[%s1017] sm:$0xff] %v1057
        %s1060 = smov [#allocation13]
        %s1061 = smov [#allocation15]
        %v1062 = vld [vmem:[%s1060] ss:$0 sm:$0xff]
        %s1064 = scalar_lea.vmem %s1060, 4294967295
        %v1065 = vld [vmem:[%s1064] sm:$0xfe]
        %v1066 = vlaneseq
        %v1067 = vshrl.u32 %v1066, 7
        %vm1068 = vcmp.eq.s32.totalorder %v1067, 0
        %v1069 = vsel %vm1068, %v1062, %v1065
        %s1070 = scalar_lea.vmem %s1060, 7
        %v1071 = vld [vmem:[%s1070] ss:$0 sm:$0xff]
        %1072 = vst [vmem:[%s1060] sm:$0xff] %v1069
        %s1073 = scalar_lea.vmem %s1060, 8
        %s1075 = scalar_lea.vmem %s1073, 4294967295
        %v1076 = vld [vmem:[%s1075] sm:$0xfe]
        %v1077 = vlaneseq
        %v1078 = vshrl.u32 %v1077, 7
        %vm1079 = vcmp.eq.s32.totalorder %v1078, 0
        %v1080 = vsel %vm1079, %v1071, %v1076
        %s1081 = scalar_lea.vmem %s1073, 7
        %v1082 = vld [vmem:[%s1081] ss:$0 sm:$0xff]
        %1083 = vst [vmem:[%s1073] sm:$0xff] %v1080
        %v1084 = vld [vmem:[%s1061] ss:$0 sm:$0xff]
        %s1085 = scalar_lea.vmem %s1060, 1
        %1086 = vst [vmem:[%s1085] sm:$0x1] %v1084
        %s1087 = scalar_lea.vmem %s1061, 8
        %s1088 = scalar_lea.vmem %s1087, 1
        %v1089 = vld [vmem:[%s1088] sm:$0x7f]
        %v1090 = vlaneseq
        %v1091 = vshrl.u32 %v1090, 7
        %vm1092 = vcmp.eq.s32.totalorder %v1091, 7
        %v1093 = vsel %vm1092, %v1082, %v1089
        %v1094 = vld [vmem:[%s1087] ss:$0 sm:$0xff]
        %1095 = vst [vmem:[%s1087] sm:$0xff] %v1093
        %s1096 = scalar_lea.vmem %s1061, 1
        %v1097 = vld [vmem:[%s1096] sm:$0x7f]
        %v1098 = vlaneseq
        %v1099 = vshrl.u32 %v1098, 7
        %vm1100 = vcmp.eq.s32.totalorder %v1099, 7
        %v1101 = vsel %vm1100, %v1094, %v1097
        %v1102 = vld [vmem:[%s1061] ss:$0 sm:$0xff]
        %1103 = vst [vmem:[%s1061] sm:$0xff] %v1101
        %s1104 = smov [#allocation23]
        %v1105 = vld [vmem:[%s1104] sm:$0xff]
        %s1106 = smov [#allocation24]
        %v1107 = vld [vmem:[%s1106] sm:$0xff]
        %s1108 = smov [#allocation8]
        %s1109 = smov [#allocation9]
        %s1110 = smov [#allocation10]
        %s1111 = smov [#allocation11]
        %v1112 = vld [vmem:[%s1108] sm:$0xff]
        %v1113 = vld [vmem:[%s1109] sm:$0xff]
        %v1114 = vld [vmem:[%s1110] sm:$0xff]
        %v1115 = vld [vmem:[%s1111] sm:$0xff]
        %v1116 = vmul.f32 %v1105, %v1112
        %v1117 = vmul.f32 %v1107, %v1114
        %v1118 = vsub.f32 %v1116, %v1117
        %v1119 = vmul.f32 %v1105, %v1113
        %v1120 = vmul.f32 %v1107, %v1115
        %v1121 = vsub.f32 %v1119, %v1120
        %v1122 = vmul.f32 %v1107, %v1112
        %v1123 = vmul.f32 %v1105, %v1114
        %v1124 = vadd.f32 %v1122, %v1123
        %v1125 = vmul.f32 %v1107, %v1113
        %v1126 = vmul.f32 %v1105, %v1115
        %v1127 = vadd.f32 %v1125, %v1126
        %1128 = vst [vmem:[%s1108] sm:$0xff] %v1118
        %1129 = vst [vmem:[%s1109] sm:$0xff] %v1121
        %1130 = vst [vmem:[%s1110] sm:$0xff] %v1124
        %1131 = vst [vmem:[%s1111] sm:$0xff] %v1127
        %s1132 = smov [#allocation23]
        %s1133 = scalar_lea.vmem %s1132, 8
        %v1134 = vld [vmem:[%s1133] sm:$0xff]
        %s1135 = smov [#allocation24]
        %s1136 = scalar_lea.vmem %s1135, 8
        %v1137 = vld [vmem:[%s1136] sm:$0xff]
        %s1138 = smov [#allocation8]
        %s1139 = scalar_lea.vmem %s1138, 8
        %s1140 = smov [#allocation9]
        %s1141 = scalar_lea.vmem %s1140, 8
        %s1142 = smov [#allocation10]
        %s1143 = scalar_lea.vmem %s1142, 8
        %s1144 = smov [#allocation11]
        %s1145 = scalar_lea.vmem %s1144, 8
        %v1146 = vld [vmem:[%s1139] sm:$0xff]
        %v1147 = vld [vmem:[%s1141] sm:$0xff]
        %v1148 = vld [vmem:[%s1143] sm:$0xff]
        %v1149 = vld [vmem:[%s1145] sm:$0xff]
        %v1150 = vmul.f32 %v1134, %v1146
        %v1151 = vmul.f32 %v1137, %v1148
        %v1152 = vsub.f32 %v1150, %v1151
        %v1153 = vmul.f32 %v1134, %v1147
        %v1154 = vmul.f32 %v1137, %v1149
        %v1155 = vsub.f32 %v1153, %v1154
        %v1156 = vmul.f32 %v1137, %v1146
        %v1157 = vmul.f32 %v1134, %v1148
        %v1158 = vadd.f32 %v1156, %v1157
        %v1159 = vmul.f32 %v1137, %v1147
        %v1160 = vmul.f32 %v1134, %v1149
        %v1161 = vadd.f32 %v1159, %v1160
        %1162 = vst [vmem:[%s1139] sm:$0xff] %v1152
        %1163 = vst [vmem:[%s1141] sm:$0xff] %v1155
        %1164 = vst [vmem:[%s1143] sm:$0xff] %v1158
        %1165 = vst [vmem:[%s1145] sm:$0xff] %v1161
        %s1166 = smov [#allocation8]
        %s1167 = smov [#allocation10]
        %v1168 = vld [vmem:[%s1166] ss:$0 sm:$0xff]
        %s1170 = scalar_lea.vmem %s1166, 4294967295
        %v1171 = vld [vmem:[%s1170] sm:$0xfe]
        %v1172 = vlaneseq
        %v1173 = vshrl.u32 %v1172, 7
        %vm1174 = vcmp.eq.s32.totalorder %v1173, 0
        %v1175 = vsel %vm1174, %v1168, %v1171
        %s1176 = scalar_lea.vmem %s1166, 7
        %v1177 = vld [vmem:[%s1176] ss:$0 sm:$0xff]
        %1178 = vst [vmem:[%s1166] sm:$0xff] %v1175
        %s1179 = scalar_lea.vmem %s1166, 8
        %s1181 = scalar_lea.vmem %s1179, 4294967295
        %v1182 = vld [vmem:[%s1181] sm:$0xfe]
        %v1183 = vlaneseq
        %v1184 = vshrl.u32 %v1183, 7
        %vm1185 = vcmp.eq.s32.totalorder %v1184, 0
        %v1186 = vsel %vm1185, %v1177, %v1182
        %s1187 = scalar_lea.vmem %s1179, 7
        %v1188 = vld [vmem:[%s1187] ss:$0 sm:$0xff]
        %1189 = vst [vmem:[%s1179] sm:$0xff] %v1186
        %v1190 = vld [vmem:[%s1167] ss:$0 sm:$0xff]
        %s1191 = scalar_lea.vmem %s1166, 1
        %1192 = vst [vmem:[%s1191] sm:$0x1] %v1190
        %s1193 = scalar_lea.vmem %s1167, 8
        %s1194 = scalar_lea.vmem %s1193, 1
        %v1195 = vld [vmem:[%s1194] sm:$0x7f]
        %v1196 = vlaneseq
        %v1197 = vshrl.u32 %v1196, 7
        %vm1198 = vcmp.eq.s32.totalorder %v1197, 7
        %v1199 = vsel %vm1198, %v1188, %v1195
        %v1200 = vld [vmem:[%s1193] ss:$0 sm:$0xff]
        %1201 = vst [vmem:[%s1193] sm:$0xff] %v1199
        %s1202 = scalar_lea.vmem %s1167, 1
        %v1203 = vld [vmem:[%s1202] sm:$0x7f]
        %v1204 = vlaneseq
        %v1205 = vshrl.u32 %v1204, 7
        %vm1206 = vcmp.eq.s32.totalorder %v1205, 7
        %v1207 = vsel %vm1206, %v1200, %v1203
        %v1208 = vld [vmem:[%s1167] ss:$0 sm:$0xff]
        %1209 = vst [vmem:[%s1167] sm:$0xff] %v1207
        %s1210 = smov [#allocation9]
        %s1211 = smov [#allocation11]
        %v1212 = vld [vmem:[%s1210] ss:$0 sm:$0xff]
        %s1214 = scalar_lea.vmem %s1210, 4294967295
        %v1215 = vld [vmem:[%s1214] sm:$0xfe]
        %v1216 = vlaneseq
        %v1217 = vshrl.u32 %v1216, 7
        %vm1218 = vcmp.eq.s32.totalorder %v1217, 0
        %v1219 = vsel %vm1218, %v1212, %v1215
        %s1220 = scalar_lea.vmem %s1210, 7
        %v1221 = vld [vmem:[%s1220] ss:$0 sm:$0xff]
        %1222 = vst [vmem:[%s1210] sm:$0xff] %v1219
        %s1223 = scalar_lea.vmem %s1210, 8
        %s1225 = scalar_lea.vmem %s1223, 4294967295
        %v1226 = vld [vmem:[%s1225] sm:$0xfe]
        %v1227 = vlaneseq
        %v1228 = vshrl.u32 %v1227, 7
        %vm1229 = vcmp.eq.s32.totalorder %v1228, 0
        %v1230 = vsel %vm1229, %v1221, %v1226
        %s1231 = scalar_lea.vmem %s1223, 7
        %v1232 = vld [vmem:[%s1231] ss:$0 sm:$0xff]
        %1233 = vst [vmem:[%s1223] sm:$0xff] %v1230
        %v1234 = vld [vmem:[%s1211] ss:$0 sm:$0xff]
        %s1235 = scalar_lea.vmem %s1210, 1
        %1236 = vst [vmem:[%s1235] sm:$0x1] %v1234
        %s1237 = scalar_lea.vmem %s1211, 8
        %s1238 = scalar_lea.vmem %s1237, 1
        %v1239 = vld [vmem:[%s1238] sm:$0x7f]
        %v1240 = vlaneseq
        %v1241 = vshrl.u32 %v1240, 7
        %vm1242 = vcmp.eq.s32.totalorder %v1241, 7
        %v1243 = vsel %vm1242, %v1232, %v1239
        %v1244 = vld [vmem:[%s1237] ss:$0 sm:$0xff]
        %1245 = vst [vmem:[%s1237] sm:$0xff] %v1243
        %s1246 = scalar_lea.vmem %s1211, 1
        %v1247 = vld [vmem:[%s1246] sm:$0x7f]
        %v1248 = vlaneseq
        %v1249 = vshrl.u32 %v1248, 7
        %vm1250 = vcmp.eq.s32.totalorder %v1249, 7
        %v1251 = vsel %vm1250, %v1244, %v1247
        %v1252 = vld [vmem:[%s1211] ss:$0 sm:$0xff]
        %1253 = vst [vmem:[%s1211] sm:$0xff] %v1251
      $region101: #{custom-call.2} parent=93 // loop_footer
        %s450 = sadd.s32 1, %s446
      $region102: #{custom-call.2} parent=93 // loop_footer_branch
        %445 = sbr.rel target = $region98
      $region103: #{custom-call.2} parent=93 // loop_exit
        _
      %s1254 = sadd.s32 %s316, 1
    $region94: #{custom-call.2} parent=1 // loop_footer
      _
    $region95: #{custom-call.2} parent=1 // loop_footer_branch
      %315 = sbr.rel target = $region91
    $region96: #{custom-call.2} parent=1 // loop_exit
      _
    %s1257 = smov [#allocation12]
    %s1258 = smov [#allocation4]
    %v1259 = vlaneseq
    %v1260 = vand.u32 %v1259, 127
    %v1261 = vmov %v1260
    %v1262 = vlaneseq
    %v1263 = vshrl.u32 %v1262, 7
    %v1264 = vmov %v1263
    %v1265 = vld [vmem:[%s1257] sm:$0xff]
    %vm1268 = vcmp.eq.s32.totalorder %v1264, %v1261
    %v1269 = vsel %vm1268, %v1265, 0.0
    %s1270 = scalar_lea.vmem %s1257, 8
    %v1271 = vld [vmem:[%s1270] sm:$0xff]
    %v1273 = vadd.s32 %v1264, 8
    %vm1274 = vcmp.eq.s32.totalorder %v1273, %v1261
    %v1275 = vsel %vm1274, %v1271, %v1269
    %v1276 = vrot.slane %v1275, 4
    %v1277 = vadd.f32 %v1275, %v1276
    %v1278 = vrot.slane %v1277, 2
    %v1279 = vadd.f32 %v1277, %v1278
    %v1280 = vrot.slane %v1279, 1
    %v1281 = vadd.f32 %v1279, %v1280
    %1282 = vst [vmem:[%s1258] sm:$0x1] %v1281
    %s1283 = smov [#allocation15]
    %s1284 = smov [#allocation6]
    %v1285 = vlaneseq
    %v1286 = vand.u32 %v1285, 127
    %v1287 = vmov %v1286
    %v1288 = vlaneseq
    %v1289 = vshrl.u32 %v1288, 7
    %v1290 = vmov %v1289
    %v1291 = vld [vmem:[%s1283] sm:$0xff]
    %vm1294 = vcmp.eq.s32.totalorder %v1290, %v1287
    %v1295 = vsel %vm1294, %v1291, 0.0
    %s1296 = scalar_lea.vmem %s1283, 8
    %v1297 = vld [vmem:[%s1296] sm:$0xff]
    %v1299 = vadd.s32 %v1290, 8
    %vm1300 = vcmp.eq.s32.totalorder %v1299, %v1287
    %v1301 = vsel %vm1300, %v1297, %v1295
    %v1302 = vrot.slane %v1301, 4
    %v1303 = vadd.f32 %v1301, %v1302
    %v1304 = vrot.slane %v1303, 2
    %v1305 = vadd.f32 %v1303, %v1304
    %v1306 = vrot.slane %v1305, 1
    %v1307 = vadd.f32 %v1305, %v1306
    %1308 = vst [vmem:[%s1284] sm:$0x1] %v1307
    %s1310 = ssub.s32 2, 1
    %v1311 = vld [vmem:[#allocation4] sm:%s1310]
    %s1313 = ssub.s32 2, 1
    %1314 = vst [vmem:[#allocation5] sm:%s1313] %v1311
    %s1316 = ssub.s32 2, 1
    %v1317 = vld [vmem:[#allocation6] sm:%s1316]
    %s1319 = ssub.s32 2, 1
    %1320 = vst [vmem:[#allocation7] sm:%s1319] %v1317
    // Predicated region
    $region104: #{custom-call.2} parent=1 // pred_check
      _
    $region105: #{custom-call.2} parent=1 // pred_check_branch
      %1322 = sbr.rel (0) target = $region107
    $region106: #{custom-call.2} parent=1 // pred_region
      // Predicated region
      $region108: #{custom-call.2} parent=106 // pred_check
        _
      $region109: #{custom-call.2} parent=106 // pred_check_branch
        %1324 = sbr.rel (0) target = $region111
      $region110: #{custom-call.2} parent=106 // pred_region
        %p1326 = scmp.gt.s32.totalorder 0, 0
        // Predicated region
        $region112: #{custom-call.2} parent=110 // pred_check
          %p1327 = pneg %p1326
        $region113: #{custom-call.2} parent=110 // pred_check_branch
          %1329 = sbr.rel (%p1327) target = $region115
        $region114: #{custom-call.2} parent=110 // pred_region
          %s1330 = ssub.s32 0, 1
          %s1331 = smul.u32 %s1330, 8
          %s1332 = scalar_lea.vmem [#allocation5], %s1331
          %v1333 = vld [vmem:[#allocation5] sm:$0xff]
          // While loop
          $region116: #{custom-call.2} parent=114 // loop_pre_header
            _
          $region117: #{custom-call.2} parent=114 // loop_header
            %s1334 = sphi [#allocation5], %s1356
            %s1335 = sphi %s4, %s1357
            %v1336 = vphi %v1333, %v1358
            %s1337 = ssub.s32 %s1332, 64
            %p1338 = scmp.gt.s32.totalorder %s1334, %s1337
          $region118: #{custom-call.2} parent=114 // loop_header_branch
            %1340 = sbr.rel (%p1338) target = $region122
          $region119: #{custom-call.2} parent=114 // loop_body
            %1341 = vst [vmem:[%s1335] sm:$0xff] %v1336
            %v1342 = vld [vmem:[%s1334 + $0x8] sm:$0xff]
            %1343 = vst [vmem:[%s1335 + $0x8] sm:$0xff] %v1342
            %v1344 = vld [vmem:[%s1334 + $0x10] sm:$0xff]
            %1345 = vst [vmem:[%s1335 + $0x10] sm:$0xff] %v1344
            %v1346 = vld [vmem:[%s1334 + $0x18] sm:$0xff]
            %1347 = vst [vmem:[%s1335 + $0x18] sm:$0xff] %v1346
            %v1348 = vld [vmem:[%s1334 + $0x20] sm:$0xff]
            %1349 = vst [vmem:[%s1335 + $0x20] sm:$0xff] %v1348
            %v1350 = vld [vmem:[%s1334 + $0x28] sm:$0xff]
            %1351 = vst [vmem:[%s1335 + $0x28] sm:$0xff] %v1350
            %v1352 = vld [vmem:[%s1334 + $0x30] sm:$0xff]
            %1353 = vst [vmem:[%s1335 + $0x30] sm:$0xff] %v1352
            %v1354 = vld [vmem:[%s1334 + $0x38] sm:$0xff]
            %1355 = vst [vmem:[%s1335 + $0x38] sm:$0xff] %v1354
          $region120: #{custom-call.2} parent=114 // loop_footer
            %s1356 = scalar_lea.vmem %s1334, 64
            %s1357 = scalar_lea.vmem %s1335, 64
            %v1358 = vld [vmem:[%s1334 + $0x40] sm:$0xff]
          $region121: #{custom-call.2} parent=114 // loop_footer_branch
            %1359 = sbr.rel target = $region117
          $region122: #{custom-call.2} parent=114 // loop_exit
            _
          // While loop
          $region123: #{custom-call.2} parent=114 // loop_pre_header
            _
          $region124: #{custom-call.2} parent=114 // loop_header
            %s1360 = sphi %s1334, %s1368
            %s1361 = sphi %s1335, %s1369
            %v1362 = vphi %v1336, %v1362
            %p1363 = scmp.gt.s32.totalorder %s1360, %s1332
          $region125: #{custom-call.2} parent=114 // loop_header_branch
            %1365 = sbr.rel (%p1363) target = $region129
          $region126: #{custom-call.2} parent=114 // loop_body
            %v1366 = vld [vmem:[%s1360] sm:$0xff]
            %1367 = vst [vmem:[%s1361] sm:$0xff] %v1366
          $region127: #{custom-call.2} parent=114 // loop_footer
            %s1368 = scalar_lea.vmem %s1360, 8
            %s1369 = scalar_lea.vmem %s1361, 8
          $region128: #{custom-call.2} parent=114 // loop_footer_branch
            %1370 = sbr.rel target = $region124
          $region129: #{custom-call.2} parent=114 // loop_exit
            _
        $region115: #{custom-call.2} parent=110 // pred_fallthru
          _
        %s1372 = ssub.s32 2, 1
        %s1373 = smul.u32 0, 8
        %s1374 = scalar_lea.vmem %s4, %s1373
        %s1375 = smul.u32 0, 8
        %s1376 = scalar_lea.vmem [#allocation5], %s1375
        %v1377 = vld [vmem:[%s1376] sm:%s1372]
        %1378 = vst [vmem:[%s1374] sm:%s1372] %v1377
      $region111: #{custom-call.2} parent=106 // pred_fallthru
        _
    $region107: #{custom-call.2} parent=1 // pred_fallthru
      _
    // Predicated region
    $region130: #{custom-call.2} parent=1 // pred_check
      _
    $region131: #{custom-call.2} parent=1 // pred_check_branch
      %1380 = sbr.rel (0) target = $region133
    $region132: #{custom-call.2} parent=1 // pred_region
      // Predicated region
      $region134: #{custom-call.2} parent=132 // pred_check
        _
      $region135: #{custom-call.2} parent=132 // pred_check_branch
        %1382 = sbr.rel (0) target = $region137
      $region136: #{custom-call.2} parent=132 // pred_region
        %p1384 = scmp.gt.s32.totalorder 0, 0
        // Predicated region
        $region138: #{custom-call.2} parent=136 // pred_check
          %p1385 = pneg %p1384
        $region139: #{custom-call.2} parent=136 // pred_check_branch
          %1387 = sbr.rel (%p1385) target = $region141
        $region140: #{custom-call.2} parent=136 // pred_region
          %s1388 = ssub.s32 0, 1
          %s1389 = smul.u32 %s1388, 8
          %s1390 = scalar_lea.vmem [#allocation7], %s1389
          %v1391 = vld [vmem:[#allocation7] sm:$0xff]
          // While loop
          $region142: #{custom-call.2} parent=140 // loop_pre_header
            _
          $region143: #{custom-call.2} parent=140 // loop_header
            %s1392 = sphi [#allocation7], %s1414
            %s1393 = sphi %s5, %s1415
            %v1394 = vphi %v1391, %v1416
            %s1395 = ssub.s32 %s1390, 64
            %p1396 = scmp.gt.s32.totalorder %s1392, %s1395
          $region144: #{custom-call.2} parent=140 // loop_header_branch
            %1398 = sbr.rel (%p1396) target = $region148
          $region145: #{custom-call.2} parent=140 // loop_body
            %1399 = vst [vmem:[%s1393] sm:$0xff] %v1394
            %v1400 = vld [vmem:[%s1392 + $0x8] sm:$0xff]
            %1401 = vst [vmem:[%s1393 + $0x8] sm:$0xff] %v1400
            %v1402 = vld [vmem:[%s1392 + $0x10] sm:$0xff]
            %1403 = vst [vmem:[%s1393 + $0x10] sm:$0xff] %v1402
            %v1404 = vld [vmem:[%s1392 + $0x18] sm:$0xff]
            %1405 = vst [vmem:[%s1393 + $0x18] sm:$0xff] %v1404
            %v1406 = vld [vmem:[%s1392 + $0x20] sm:$0xff]
            %1407 = vst [vmem:[%s1393 + $0x20] sm:$0xff] %v1406
            %v1408 = vld [vmem:[%s1392 + $0x28] sm:$0xff]
            %1409 = vst [vmem:[%s1393 + $0x28] sm:$0xff] %v1408
            %v1410 = vld [vmem:[%s1392 + $0x30] sm:$0xff]
            %1411 = vst [vmem:[%s1393 + $0x30] sm:$0xff] %v1410
            %v1412 = vld [vmem:[%s1392 + $0x38] sm:$0xff]
            %1413 = vst [vmem:[%s1393 + $0x38] sm:$0xff] %v1412
          $region146: #{custom-call.2} parent=140 // loop_footer
            %s1414 = scalar_lea.vmem %s1392, 64
            %s1415 = scalar_lea.vmem %s1393, 64
            %v1416 = vld [vmem:[%s1392 + $0x40] sm:$0xff]
          $region147: #{custom-call.2} parent=140 // loop_footer_branch
            %1417 = sbr.rel target = $region143
          $region148: #{custom-call.2} parent=140 // loop_exit
            _
          // While loop
          $region149: #{custom-call.2} parent=140 // loop_pre_header
            _
          $region150: #{custom-call.2} parent=140 // loop_header
            %s1418 = sphi %s1392, %s1426
            %s1419 = sphi %s1393, %s1427
            %v1420 = vphi %v1394, %v1420
            %p1421 = scmp.gt.s32.totalorder %s1418, %s1390
          $region151: #{custom-call.2} parent=140 // loop_header_branch
            %1423 = sbr.rel (%p1421) target = $region155
          $region152: #{custom-call.2} parent=140 // loop_body
            %v1424 = vld [vmem:[%s1418] sm:$0xff]
            %1425 = vst [vmem:[%s1419] sm:$0xff] %v1424
          $region153: #{custom-call.2} parent=140 // loop_footer
            %s1426 = scalar_lea.vmem %s1418, 8
            %s1427 = scalar_lea.vmem %s1419, 8
          $region154: #{custom-call.2} parent=140 // loop_footer_branch
            %1428 = sbr.rel target = $region150
          $region155: #{custom-call.2} parent=140 // loop_exit
            _
        $region141: #{custom-call.2} parent=136 // pred_fallthru
          _
        %s1430 = ssub.s32 2, 1
        %s1431 = smul.u32 0, 8
        %s1432 = scalar_lea.vmem %s5, %s1431
        %s1433 = smul.u32 0, 8
        %s1434 = scalar_lea.vmem [#allocation7], %s1433
        %v1435 = vld [vmem:[%s1434] sm:%s1430]
        %1436 = vst [vmem:[%s1432] sm:%s1430] %v1435
      $region137: #{custom-call.2} parent=132 // pred_fallthru
        _
    $region133: #{custom-call.2} parent=1 // pred_fallthru
      _
    // Predicated region
    $region156: #{custom-call.2} parent=1 // pred_check
      _
    $region157: #{custom-call.2} parent=1 // pred_check_branch
      %1438 = sbr.rel (0) target = $region159
    $region158: #{custom-call.2} parent=1 // pred_region
      %p1440 = scmp.gt.s32.totalorder 2, 0
      // Predicated region
      $region160: #{custom-call.2} parent=158 // pred_check
        %p1441 = pneg %p1440
      $region161: #{custom-call.2} parent=158 // pred_check_branch
        %1443 = sbr.rel (%p1441) target = $region163
      $region162: #{custom-call.2} parent=158 // pred_region
        %s1444 = ssub.s32 2, 1
        %s1445 = smul.u32 %s1444, 8
        %s1446 = scalar_lea.vmem [#allocation8], %s1445
        %v1447 = vld [vmem:[#allocation8] sm:$0xff]
        // While loop
        $region164: #{custom-call.2} parent=162 // loop_pre_header
          _
        $region165: #{custom-call.2} parent=162 // loop_header
          %s1448 = sphi [#allocation8], %s1470
          %s1449 = sphi %s6, %s1471
          %v1450 = vphi %v1447, %v1472
          %s1451 = ssub.s32 %s1446, 64
          %p1452 = scmp.gt.s32.totalorder %s1448, %s1451
        $region166: #{custom-call.2} parent=162 // loop_header_branch
          %1454 = sbr.rel (%p1452) target = $region170
        $region167: #{custom-call.2} parent=162 // loop_body
          %1455 = vst [vmem:[%s1449] sm:$0xff] %v1450
          %v1456 = vld [vmem:[%s1448 + $0x8] sm:$0xff]
          %1457 = vst [vmem:[%s1449 + $0x8] sm:$0xff] %v1456
          %v1458 = vld [vmem:[%s1448 + $0x10] sm:$0xff]
          %1459 = vst [vmem:[%s1449 + $0x10] sm:$0xff] %v1458
          %v1460 = vld [vmem:[%s1448 + $0x18] sm:$0xff]
          %1461 = vst [vmem:[%s1449 + $0x18] sm:$0xff] %v1460
          %v1462 = vld [vmem:[%s1448 + $0x20] sm:$0xff]
          %1463 = vst [vmem:[%s1449 + $0x20] sm:$0xff] %v1462
          %v1464 = vld [vmem:[%s1448 + $0x28] sm:$0xff]
          %1465 = vst [vmem:[%s1449 + $0x28] sm:$0xff] %v1464
          %v1466 = vld [vmem:[%s1448 + $0x30] sm:$0xff]
          %1467 = vst [vmem:[%s1449 + $0x30] sm:$0xff] %v1466
          %v1468 = vld [vmem:[%s1448 + $0x38] sm:$0xff]
          %1469 = vst [vmem:[%s1449 + $0x38] sm:$0xff] %v1468
        $region168: #{custom-call.2} parent=162 // loop_footer
          %s1470 = scalar_lea.vmem %s1448, 64
          %s1471 = scalar_lea.vmem %s1449, 64
          %v1472 = vld [vmem:[%s1448 + $0x40] sm:$0xff]
        $region169: #{custom-call.2} parent=162 // loop_footer_branch
          %1473 = sbr.rel target = $region165
        $region170: #{custom-call.2} parent=162 // loop_exit
          _
        // While loop
        $region171: #{custom-call.2} parent=162 // loop_pre_header
          _
        $region172: #{custom-call.2} parent=162 // loop_header
          %s1474 = sphi %s1448, %s1482
          %s1475 = sphi %s1449, %s1483
          %v1476 = vphi %v1450, %v1476
          %p1477 = scmp.gt.s32.totalorder %s1474, %s1446
        $region173: #{custom-call.2} parent=162 // loop_header_branch
          %1479 = sbr.rel (%p1477) target = $region177
        $region174: #{custom-call.2} parent=162 // loop_body
          %v1480 = vld [vmem:[%s1474] sm:$0xff]
          %1481 = vst [vmem:[%s1475] sm:$0xff] %v1480
        $region175: #{custom-call.2} parent=162 // loop_footer
          %s1482 = scalar_lea.vmem %s1474, 8
          %s1483 = scalar_lea.vmem %s1475, 8
        $region176: #{custom-call.2} parent=162 // loop_footer_branch
          %1484 = sbr.rel target = $region172
        $region177: #{custom-call.2} parent=162 // loop_exit
          _
      $region163: #{custom-call.2} parent=158 // pred_fallthru
        _
      %s1486 = ssub.s32 1, 1
      %s1487 = smul.u32 2, 8
      %s1488 = scalar_lea.vmem %s6, %s1487
      %s1489 = smul.u32 2, 8
      %s1490 = scalar_lea.vmem [#allocation8], %s1489
      %v1491 = vld [vmem:[%s1490] sm:%s1486]
      %1492 = vst [vmem:[%s1488] sm:%s1486] %v1491
    $region159: #{custom-call.2} parent=1 // pred_fallthru
      _
    // Predicated region
    $region178: #{custom-call.2} parent=1 // pred_check
      _
    $region179: #{custom-call.2} parent=1 // pred_check_branch
      %1494 = sbr.rel (0) target = $region181
    $region180: #{custom-call.2} parent=1 // pred_region
      %p1496 = scmp.gt.s32.totalorder 2, 0
      // Predicated region
      $region182: #{custom-call.2} parent=180 // pred_check
        %p1497 = pneg %p1496
      $region183: #{custom-call.2} parent=180 // pred_check_branch
        %1499 = sbr.rel (%p1497) target = $region185
      $region184: #{custom-call.2} parent=180 // pred_region
        %s1500 = ssub.s32 2, 1
        %s1501 = smul.u32 %s1500, 8
        %s1502 = scalar_lea.vmem [#allocation9], %s1501
        %v1503 = vld [vmem:[#allocation9] sm:$0xff]
        // While loop
        $region186: #{custom-call.2} parent=184 // loop_pre_header
          _
        $region187: #{custom-call.2} parent=184 // loop_header
          %s1504 = sphi [#allocation9], %s1526
          %s1505 = sphi %s7, %s1527
          %v1506 = vphi %v1503, %v1528
          %s1507 = ssub.s32 %s1502, 64
          %p1508 = scmp.gt.s32.totalorder %s1504, %s1507
        $region188: #{custom-call.2} parent=184 // loop_header_branch
          %1510 = sbr.rel (%p1508) target = $region192
        $region189: #{custom-call.2} parent=184 // loop_body
          %1511 = vst [vmem:[%s1505] sm:$0xff] %v1506
          %v1512 = vld [vmem:[%s1504 + $0x8] sm:$0xff]
          %1513 = vst [vmem:[%s1505 + $0x8] sm:$0xff] %v1512
          %v1514 = vld [vmem:[%s1504 + $0x10] sm:$0xff]
          %1515 = vst [vmem:[%s1505 + $0x10] sm:$0xff] %v1514
          %v1516 = vld [vmem:[%s1504 + $0x18] sm:$0xff]
          %1517 = vst [vmem:[%s1505 + $0x18] sm:$0xff] %v1516
          %v1518 = vld [vmem:[%s1504 + $0x20] sm:$0xff]
          %1519 = vst [vmem:[%s1505 + $0x20] sm:$0xff] %v1518
          %v1520 = vld [vmem:[%s1504 + $0x28] sm:$0xff]
          %1521 = vst [vmem:[%s1505 + $0x28] sm:$0xff] %v1520
          %v1522 = vld [vmem:[%s1504 + $0x30] sm:$0xff]
          %1523 = vst [vmem:[%s1505 + $0x30] sm:$0xff] %v1522
          %v1524 = vld [vmem:[%s1504 + $0x38] sm:$0xff]
          %1525 = vst [vmem:[%s1505 + $0x38] sm:$0xff] %v1524
        $region190: #{custom-call.2} parent=184 // loop_footer
          %s1526 = scalar_lea.vmem %s1504, 64
          %s1527 = scalar_lea.vmem %s1505, 64
          %v1528 = vld [vmem:[%s1504 + $0x40] sm:$0xff]
        $region191: #{custom-call.2} parent=184 // loop_footer_branch
          %1529 = sbr.rel target = $region187
        $region192: #{custom-call.2} parent=184 // loop_exit
          _
        // While loop
        $region193: #{custom-call.2} parent=184 // loop_pre_header
          _
        $region194: #{custom-call.2} parent=184 // loop_header
          %s1530 = sphi %s1504, %s1538
          %s1531 = sphi %s1505, %s1539
          %v1532 = vphi %v1506, %v1532
          %p1533 = scmp.gt.s32.totalorder %s1530, %s1502
        $region195: #{custom-call.2} parent=184 // loop_header_branch
          %1535 = sbr.rel (%p1533) target = $region199
        $region196: #{custom-call.2} parent=184 // loop_body
          %v1536 = vld [vmem:[%s1530] sm:$0xff]
          %1537 = vst [vmem:[%s1531] sm:$0xff] %v1536
        $region197: #{custom-call.2} parent=184 // loop_footer
          %s1538 = scalar_lea.vmem %s1530, 8
          %s1539 = scalar_lea.vmem %s1531, 8
        $region198: #{custom-call.2} parent=184 // loop_footer_branch
          %1540 = sbr.rel target = $region194
        $region199: #{custom-call.2} parent=184 // loop_exit
          _
      $region185: #{custom-call.2} parent=180 // pred_fallthru
        _
      %s1542 = ssub.s32 1, 1
      %s1543 = smul.u32 2, 8
      %s1544 = scalar_lea.vmem %s7, %s1543
      %s1545 = smul.u32 2, 8
      %s1546 = scalar_lea.vmem [#allocation9], %s1545
      %v1547 = vld [vmem:[%s1546] sm:%s1542]
      %1548 = vst [vmem:[%s1544] sm:%s1542] %v1547
    $region181: #{custom-call.2} parent=1 // pred_fallthru
      _
    // Predicated region
    $region200: #{custom-call.2} parent=1 // pred_check
      _
    $region201: #{custom-call.2} parent=1 // pred_check_branch
      %1550 = sbr.rel (0) target = $region203
    $region202: #{custom-call.2} parent=1 // pred_region
      %p1552 = scmp.gt.s32.totalorder 2, 0
      // Predicated region
      $region204: #{custom-call.2} parent=202 // pred_check
        %p1553 = pneg %p1552
      $region205: #{custom-call.2} parent=202 // pred_check_branch
        %1555 = sbr.rel (%p1553) target = $region207
      $region206: #{custom-call.2} parent=202 // pred_region
        %s1556 = ssub.s32 2, 1
        %s1557 = smul.u32 %s1556, 8
        %s1558 = scalar_lea.vmem [#allocation10], %s1557
        %v1559 = vld [vmem:[#allocation10] sm:$0xff]
        // While loop
        $region208: #{custom-call.2} parent=206 // loop_pre_header
          _
        $region209: #{custom-call.2} parent=206 // loop_header
          %s1560 = sphi [#allocation10], %s1582
          %s1561 = sphi %s8, %s1583
          %v1562 = vphi %v1559, %v1584
          %s1563 = ssub.s32 %s1558, 64
          %p1564 = scmp.gt.s32.totalorder %s1560, %s1563
        $region210: #{custom-call.2} parent=206 // loop_header_branch
          %1566 = sbr.rel (%p1564) target = $region214
        $region211: #{custom-call.2} parent=206 // loop_body
          %1567 = vst [vmem:[%s1561] sm:$0xff] %v1562
          %v1568 = vld [vmem:[%s1560 + $0x8] sm:$0xff]
          %1569 = vst [vmem:[%s1561 + $0x8] sm:$0xff] %v1568
          %v1570 = vld [vmem:[%s1560 + $0x10] sm:$0xff]
          %1571 = vst [vmem:[%s1561 + $0x10] sm:$0xff] %v1570
          %v1572 = vld [vmem:[%s1560 + $0x18] sm:$0xff]
          %1573 = vst [vmem:[%s1561 + $0x18] sm:$0xff] %v1572
          %v1574 = vld [vmem:[%s1560 + $0x20] sm:$0xff]
          %1575 = vst [vmem:[%s1561 + $0x20] sm:$0xff] %v1574
          %v1576 = vld [vmem:[%s1560 + $0x28] sm:$0xff]
          %1577 = vst [vmem:[%s1561 + $0x28] sm:$0xff] %v1576
          %v1578 = vld [vmem:[%s1560 + $0x30] sm:$0xff]
          %1579 = vst [vmem:[%s1561 + $0x30] sm:$0xff] %v1578
          %v1580 = vld [vmem:[%s1560 + $0x38] sm:$0xff]
          %1581 = vst [vmem:[%s1561 + $0x38] sm:$0xff] %v1580
        $region212: #{custom-call.2} parent=206 // loop_footer
          %s1582 = scalar_lea.vmem %s1560, 64
          %s1583 = scalar_lea.vmem %s1561, 64
          %v1584 = vld [vmem:[%s1560 + $0x40] sm:$0xff]
        $region213: #{custom-call.2} parent=206 // loop_footer_branch
          %1585 = sbr.rel target = $region209
        $region214: #{custom-call.2} parent=206 // loop_exit
          _
        // While loop
        $region215: #{custom-call.2} parent=206 // loop_pre_header
          _
        $region216: #{custom-call.2} parent=206 // loop_header
          %s1586 = sphi %s1560, %s1594
          %s1587 = sphi %s1561, %s1595
          %v1588 = vphi %v1562, %v1588
          %p1589 = scmp.gt.s32.totalorder %s1586, %s1558
        $region217: #{custom-call.2} parent=206 // loop_header_branch
          %1591 = sbr.rel (%p1589) target = $region221
        $region218: #{custom-call.2} parent=206 // loop_body
          %v1592 = vld [vmem:[%s1586] sm:$0xff]
          %1593 = vst [vmem:[%s1587] sm:$0xff] %v1592
        $region219: #{custom-call.2} parent=206 // loop_footer
          %s1594 = scalar_lea.vmem %s1586, 8
          %s1595 = scalar_lea.vmem %s1587, 8
        $region220: #{custom-call.2} parent=206 // loop_footer_branch
          %1596 = sbr.rel target = $region216
        $region221: #{custom-call.2} parent=206 // loop_exit
          _
      $region207: #{custom-call.2} parent=202 // pred_fallthru
        _
      %s1598 = ssub.s32 1, 1
      %s1599 = smul.u32 2, 8
      %s1600 = scalar_lea.vmem %s8, %s1599
      %s1601 = smul.u32 2, 8
      %s1602 = scalar_lea.vmem [#allocation10], %s1601
      %v1603 = vld [vmem:[%s1602] sm:%s1598]
      %1604 = vst [vmem:[%s1600] sm:%s1598] %v1603
    $region203: #{custom-call.2} parent=1 // pred_fallthru
      _
    // Predicated region
    $region222: #{custom-call.2} parent=1 // pred_check
      _
    $region223: #{custom-call.2} parent=1 // pred_check_branch
      %1606 = sbr.rel (0) target = $region225
    $region224: #{custom-call.2} parent=1 // pred_region
      %p1608 = scmp.gt.s32.totalorder 2, 0
      // Predicated region
      $region226: #{custom-call.2} parent=224 // pred_check
        %p1609 = pneg %p1608
      $region227: #{custom-call.2} parent=224 // pred_check_branch
        %1611 = sbr.rel (%p1609) target = $region229
      $region228: #{custom-call.2} parent=224 // pred_region
        %s1612 = ssub.s32 2, 1
        %s1613 = smul.u32 %s1612, 8
        %s1614 = scalar_lea.vmem [#allocation11], %s1613
        %v1615 = vld [vmem:[#allocation11] sm:$0xff]
        // While loop
        $region230: #{custom-call.2} parent=228 // loop_pre_header
          _
        $region231: #{custom-call.2} parent=228 // loop_header
          %s1616 = sphi [#allocation11], %s1638
          %s1617 = sphi %s9, %s1639
          %v1618 = vphi %v1615, %v1640
          %s1619 = ssub.s32 %s1614, 64
          %p1620 = scmp.gt.s32.totalorder %s1616, %s1619
        $region232: #{custom-call.2} parent=228 // loop_header_branch
          %1622 = sbr.rel (%p1620) target = $region236
        $region233: #{custom-call.2} parent=228 // loop_body
          %1623 = vst [vmem:[%s1617] sm:$0xff] %v1618
          %v1624 = vld [vmem:[%s1616 + $0x8] sm:$0xff]
          %1625 = vst [vmem:[%s1617 + $0x8] sm:$0xff] %v1624
          %v1626 = vld [vmem:[%s1616 + $0x10] sm:$0xff]
          %1627 = vst [vmem:[%s1617 + $0x10] sm:$0xff] %v1626
          %v1628 = vld [vmem:[%s1616 + $0x18] sm:$0xff]
          %1629 = vst [vmem:[%s1617 + $0x18] sm:$0xff] %v1628
          %v1630 = vld [vmem:[%s1616 + $0x20] sm:$0xff]
          %1631 = vst [vmem:[%s1617 + $0x20] sm:$0xff] %v1630
          %v1632 = vld [vmem:[%s1616 + $0x28] sm:$0xff]
          %1633 = vst [vmem:[%s1617 + $0x28] sm:$0xff] %v1632
          %v1634 = vld [vmem:[%s1616 + $0x30] sm:$0xff]
          %1635 = vst [vmem:[%s1617 + $0x30] sm:$0xff] %v1634
          %v1636 = vld [vmem:[%s1616 + $0x38] sm:$0xff]
          %1637 = vst [vmem:[%s1617 + $0x38] sm:$0xff] %v1636
        $region234: #{custom-call.2} parent=228 // loop_footer
          %s1638 = scalar_lea.vmem %s1616, 64
          %s1639 = scalar_lea.vmem %s1617, 64
          %v1640 = vld [vmem:[%s1616 + $0x40] sm:$0xff]
        $region235: #{custom-call.2} parent=228 // loop_footer_branch
          %1641 = sbr.rel target = $region231
        $region236: #{custom-call.2} parent=228 // loop_exit
          _
        // While loop
        $region237: #{custom-call.2} parent=228 // loop_pre_header
          _
        $region238: #{custom-call.2} parent=228 // loop_header
          %s1642 = sphi %s1616, %s1650
          %s1643 = sphi %s1617, %s1651
          %v1644 = vphi %v1618, %v1644
          %p1645 = scmp.gt.s32.totalorder %s1642, %s1614
        $region239: #{custom-call.2} parent=228 // loop_header_branch
          %1647 = sbr.rel (%p1645) target = $region243
        $region240: #{custom-call.2} parent=228 // loop_body
          %v1648 = vld [vmem:[%s1642] sm:$0xff]
          %1649 = vst [vmem:[%s1643] sm:$0xff] %v1648
        $region241: #{custom-call.2} parent=228 // loop_footer
          %s1650 = scalar_lea.vmem %s1642, 8
          %s1651 = scalar_lea.vmem %s1643, 8
        $region242: #{custom-call.2} parent=228 // loop_footer_branch
          %1652 = sbr.rel target = $region238
        $region243: #{custom-call.2} parent=228 // loop_exit
          _
      $region229: #{custom-call.2} parent=224 // pred_fallthru
        _
      %s1654 = ssub.s32 1, 1
      %s1655 = smul.u32 2, 8
      %s1656 = scalar_lea.vmem %s9, %s1655
      %s1657 = smul.u32 2, 8
      %s1658 = scalar_lea.vmem [#allocation11], %s1657
      %v1659 = vld [vmem:[%s1658] sm:%s1654]
      %1660 = vst [vmem:[%s1656] sm:%s1654] %v1659
    $region225: #{custom-call.2} parent=1 // pred_fallthru
      _
    // Predicated region
    $region244: #{custom-call.2} parent=1 // pred_check
      _
    $region245: #{custom-call.2} parent=1 // pred_check_branch
      %1662 = sbr.rel (0) target = $region247
    $region246: #{custom-call.2} parent=1 // pred_region
      _
    $region247: #{custom-call.2} parent=1 // pred_fallthru
      _
    // Predicated region
    $region248: #{custom-call.2} parent=1 // pred_check
      _
    $region249: #{custom-call.2} parent=1 // pred_check_branch
      %1664 = sbr.rel (0) target = $region251
    $region250: #{custom-call.2} parent=1 // pred_region
      _
    $region251: #{custom-call.2} parent=1 // pred_fallthru
      _

// kernel: rkn_layer_forward.1
$region0: #{rkn_layer_forward.1}
  #allocation0 [shape = 'u32[]', space=smem, size = 0x4, offset = 0x4, fixed_abs, tag = 'smem constant byte address 0x4 - core index']
  #allocation1 [shape = 'u32[72,128]{1,0:T(1,128)}', space=vmem, size = 0x9000, scoped, tag = 'internal scratch']
  %s0 = inlined_call_operand.vmem [shape: f32[16,4], index: 0, kind: input, shape index: {}]
  %s1 = inlined_call_operand.vmem [shape: f32[4,64], index: 1, kind: input, shape index: {}]
  %s2 = inlined_call_operand.vmem [shape: f32[32,128], index: 2, kind: input, shape index: {}]
  %s3 = inlined_call_operand.vmem [shape: f32[20,128], index: 3, kind: output, shape index: {}]
  %s4 = sld [smem:[#allocation0]]
  $region22: #{rkn_layer_forward.1} parent=0
    _
  %s6 = ssub.s32 1, %s4
  %s7 = scalar_select 0, %s6, %s4
  // Predicated region
  $region2: #{rkn_layer_forward.1} parent=0 // pred_check
    _
  $region3: #{rkn_layer_forward.1} parent=0 // pred_check_branch
    %9 = sbr.rel (0) target = $region5
  $region4: #{rkn_layer_forward.1} parent=0 // pred_region
    _
  $region5: #{rkn_layer_forward.1} parent=0 // pred_fallthru
    _
  // Predicated region
  $region6: #{rkn_layer_forward.1} parent=0 // pred_check
    _
  $region7: #{rkn_layer_forward.1} parent=0 // pred_check_branch
    %11 = sbr.rel (0) target = $region9
  $region8: #{rkn_layer_forward.1} parent=0 // pred_region
    _
  $region9: #{rkn_layer_forward.1} parent=0 // pred_fallthru
    _
  // Predicated region
  $region10: #{rkn_layer_forward.1} parent=0 // pred_check
    _
  $region11: #{rkn_layer_forward.1} parent=0 // pred_check_branch
    %13 = sbr.rel (0) target = $region13
  $region12: #{rkn_layer_forward.1} parent=0 // pred_region
    _
  $region13: #{rkn_layer_forward.1} parent=0 // pred_fallthru
    _
  %v14 = vld [vmem:[%s0] sm:$0xff]
  %v15 = vld [vmem:[%s0 + $0x8] sm:$0xff]
  %v16 = vmul.f32 %v14, %v14
  %v17 = vmul.f32 %v15, %v15
  %vm18 = vcmask 31744
  %v19 = vsel %vm18, %v16, 0.0
  %20 = vadd.xlane.f32.xlu0 %v19
  %v21 = vpop.xlane.xlu0 %20
  %v22 = vsel %vm18, %v17, 0.0
  %23 = vadd.xlane.f32.xlu0 %v22
  %v24 = vpop.xlane.xlu0 %23
  %v25 = vrsqrt.pop %v21
  %v26 = vmul.f32 %v25, %v21
  %v27 = vmul.f32 %v26, %v25
  %v28 = vmul.f32 0.5, %v27
  %v29 = vsub.f32 1.5, %v28
  %v30 = vmul.f32 %v25, %v29
  %v31 = vmul.f32 %v21, %v30
  %vm32 = vcmp.eq.f32.partialorder %v21, inf
  %v33 = vsel %vm32, %v21, %v31
  %vm34 = vcmp.eq.f32.partialorder %v21, 0.0
  %v35 = vand.u32 %v21, 2147483648
  %v36 = vsel %vm34, %v35, %v33
  %v37 = vrsqrt.pop %v24
  %v38 = vmul.f32 %v37, %v24
  %v39 = vmul.f32 %v38, %v37
  %v40 = vmul.f32 0.5, %v39
  %v41 = vsub.f32 1.5, %v40
  %v42 = vmul.f32 %v37, %v41
  %v43 = vmul.f32 %v24, %v42
  %vm44 = vcmp.eq.f32.partialorder %v24, inf
  %v45 = vsel %vm44, %v24, %v43
  %vm46 = vcmp.eq.f32.partialorder %v24, 0.0
  %v47 = vand.u32 %v24, 2147483648
  %v48 = vsel %vm46, %v47, %v45
  %v49 = vld [vmem:[%s1] sm:$0xf]
  %51 = vset.pattern.permute.xlu0 0
  %52 = vperm.xlu0 %51, %v14
  %v53 = vpop.permute.xlu0 %52
  %56 = vset.pattern.permute.xlu0 0
  %57 = vperm.xlu0 %56, %v15
  %v58 = vpop.permute.xlu0 %57
  %v60 = vperm.slane %v49, 0
  %v61 = vmul.f32 %v53, %v60
  %v62 = vmul.f32 %v58, %v60
  %63 = vset.pattern.permute.xlu0 1
  %64 = vperm.xlu0 %63, %v14
  %v65 = vpop.permute.xlu0 %64
  %67 = vset.pattern.permute.xlu0 1
  %68 = vperm.xlu0 %67, %v15
  %v69 = vpop.permute.xlu0 %68
  %v71 = vperm.slane %v49, 1
  %v72 = vmul.f32 %v65, %v71
  %v73 = vmul.f32 %v69, %v71
  %v74 = vadd.f32 %v61, %v72
  %v75 = vadd.f32 %v62, %v73
  %76 = vset.pattern.permute.xlu0 2
  %77 = vperm.xlu0 %76, %v14
  %v78 = vpop.permute.xlu0 %77
  %80 = vset.pattern.permute.xlu0 2
  %81 = vperm.xlu0 %80, %v15
  %v82 = vpop.permute.xlu0 %81
  %v84 = vperm.slane %v49, 2
  %v85 = vmul.f32 %v78, %v84
  %v86 = vmul.f32 %v82, %v84
  %v87 = vadd.f32 %v74, %v85
  %v88 = vadd.f32 %v75, %v86
  %89 = vset.pattern.permute.xlu0 3
  %90 = vperm.xlu0 %89, %v14
  %v91 = vpop.permute.xlu0 %90
  %93 = vset.pattern.permute.xlu0 3
  %94 = vperm.xlu0 %93, %v15
  %v95 = vpop.permute.xlu0 %94
  %v97 = vperm.slane %v49, 3
  %v98 = vmul.f32 %v91, %v97
  %v99 = vmul.f32 %v95, %v97
  %v100 = vadd.f32 %v87, %v98
  %v101 = vadd.f32 %v88, %v99
  %v102 = vmax.f32 %v36, 0.0001
  %v103 = vmax.f32 %v48, 0.0001
  %v104 = vrcp.pop %v102
  %v105 = vmul.f32 %v102, %v104
  %v106 = vsub.f32 1.0, %v105
  %v107 = vmul.f32 %v104, %v106
  %v108 = vadd.f32 %v104, %v107
  %vm109 = vweird.f32 %v102
  %vm110 = vweird.f32 %v104
  %vm111 = vmor %vm109, %vm110
  %v112 = vsel %vm111, %v104, %v108
  %v113 = vand.u32 2147483647, %v102
  %vm114 = vcmp.eq.f32.partialorder %v113, 8.507059e+37
  %v115 = vand.u32 %v102, 2147483648
  %v116 = vor.u32 1.1754944e-38, %v115
  %v117 = vsel %vm114, %v116, %v112
  %v118 = vmul.f32 1.0, %v117
  %v119 = vrcp.pop %v103
  %v120 = vmul.f32 %v103, %v119
  %v121 = vsub.f32 1.0, %v120
  %v122 = vmul.f32 %v119, %v121
  %v123 = vadd.f32 %v119, %v122
  %vm124 = vweird.f32 %v103
  %vm125 = vweird.f32 %v119
  %vm126 = vmor %vm124, %vm125
  %v127 = vsel %vm126, %v119, %v123
  %v128 = vand.u32 2147483647, %v103
  %vm129 = vcmp.eq.f32.partialorder %v128, 8.507059e+37
  %v130 = vand.u32 %v103, 2147483648
  %v131 = vor.u32 1.1754944e-38, %v130
  %v132 = vsel %vm129, %v131, %v127
  %v133 = vmul.f32 1.0, %v132
  %v134 = vmul.f32 %v100, %v118
  %v135 = vmul.f32 %v101, %v133
  %v136 = vsub.f32 %v134, 2.0
  %v137 = vsub.f32 %v135, 2.0
  %v138 = vmul.f32 %v136, 1.442695
  %v139 = vpow.pop %v138
  %v140 = vmul.f32 %v137, 1.442695
  %v141 = vpow.pop %v140
  %v142 = vmul.f32 %v36, %v139
  %v143 = vmul.f32 %v48, %v141
  %v144 = vadd.f32 %v142, 0.0
  %v145 = vmul.f32 %v142, 0.0
  %v146 = vadd.f32 %v145, 0.0
  %v147 = vmul.f32 %v144, 0.5
  %v149 = vrot.slane %v142, 2
  %v151 = vadd.f32 %v147, %v149
  %v153 = vrot.slane %v144, 6
  %154 = vrot.lane.b32.xlu0 %v153, 32
  %v155 = vpop.permute.xlu0 %154
  %v157 = vmul.f32 %v142, %v155
  %v158 = vmul.f32 %v146, 0.5
  %v160 = vrot.slane %v157, 2
  %v162 = vadd.f32 %v158, %v160
  %v163 = vmul.f32 %v151, 0.5
  %v164 = vrot.slane %v142, 4
  %v166 = vadd.f32 %v163, %v164
  %v168 = vrot.slane %v151, 4
  %169 = vrot.lane.b32.xlu0 %v168, 32
  %v170 = vpop.permute.xlu0 %169
  %v172 = vmul.f32 %v142, %v170
  %v173 = vmul.f32 %v162, 0.5
  %v175 = vrot.slane %v172, 4
  %v177 = vadd.f32 %v173, %v175
  %v178 = vmul.f32 %v166, 0.5
  %v179 = vrot.slane %v142, 6
  %v181 = vadd.f32 %v178, %v179
  %v183 = vrot.slane %v166, 2
  %184 = vrot.lane.b32.xlu0 %v183, 32
  %v185 = vpop.permute.xlu0 %184
  %v187 = vmul.f32 %v142, %v185
  %v188 = vmul.f32 %v177, 0.5
  %v190 = vrot.slane %v187, 6
  %v192 = vadd.f32 %v188, %v190
  %v193 = vmul.f32 %v181, 0.5
  %v194 = vadd.f32 %v193, %v143
  %196 = vrot.lane.b32.xlu0 %v181, 32
  %v197 = vpop.permute.xlu0 %196
  %v199 = vmul.f32 %v143, %v197
  %v200 = vmul.f32 %v192, 0.5
  %v201 = vadd.f32 %v200, %v199
  %v202 = vmul.f32 %v194, 0.5
  %v204 = vrot.slane %v143, 2
  %v206 = vadd.f32 %v202, %v204
  %v208 = vrot.slane %v194, 6
  %209 = vrot.lane.b32.xlu0 %v208, 32
  %v210 = vpop.permute.xlu0 %209
  %v212 = vmul.f32 %v143, %v210
  %v213 = vmul.f32 %v201, 0.5
  %v215 = vrot.slane %v212, 2
  %v217 = vadd.f32 %v213, %v215
  %v218 = vmul.f32 %v206, 0.5
  %v219 = vrot.slane %v143, 4
  %v221 = vadd.f32 %v218, %v219
  %v223 = vrot.slane %v206, 4
  %224 = vrot.lane.b32.xlu0 %v223, 32
  %v225 = vpop.permute.xlu0 %224
  %v227 = vmul.f32 %v143, %v225
  %v228 = vmul.f32 %v217, 0.5
  %v230 = vrot.slane %v227, 4
  %v232 = vadd.f32 %v228, %v230
  %v233 = vmul.f32 %v221, 0.5
  %v234 = vrot.slane %v143, 6
  %v236 = vadd.f32 %v233, %v234
  %v238 = vrot.slane %v221, 2
  %239 = vrot.lane.b32.xlu0 %v238, 32
  %v240 = vpop.permute.xlu0 %239
  %v242 = vmul.f32 %v143, %v240
  %v243 = vmul.f32 %v232, 0.5
  %v245 = vrot.slane %v242, 6
  %v247 = vadd.f32 %v243, %v245
  %v249 = vrot.slane %v162, 6
  %v252 = vrot.slane %v177, 4
  %v255 = vrot.slane %v192, 2
  %v258 = vrot.slane %v217, 6
  %v261 = vrot.slane %v232, 4
  %v264 = vrot.slane %v247, 2
  %267 = vrot.lane.b32.xlu0 %v236, 32
  %v268 = vpop.permute.xlu0 %267
  %v270 = vrot.slane %v247, 6
  %vm272 = vcmask 1041408
  %v273 = vsel %vm272, %v146, %v249
  %vm274 = vcmask 1043456
  %v275 = vsel %vm274, %v273, %v252
  %vm276 = vcmask 1045504
  %v277 = vsel %vm276, %v275, %v255
  %v278 = vsel %vm272, %v201, %v258
  %v279 = vsel %vm274, %v278, %v261
  %v280 = vsel %vm276, %v279, %v264
  %v281 = vsel %vm272, %v268, %v270
  %v282 = vld [vmem:[%s2] sm:$0xff]
  %v283 = vld [vmem:[%s2 + $0x8] sm:$0xff]
  %v284 = vld [vmem:[%s2 + $0x10] sm:$0xff]
  %v285 = vld [vmem:[%s2 + $0x18] sm:$0xff]
  %289 = vrot.lane.b32.xlu0 %v277, 96
  %v290 = vpop.permute.xlu0 %289
  %291 = vrot.lane.b32.xlu0 %v280, 96
  %v292 = vpop.permute.xlu0 %291
  %293 = vrot.lane.b32.xlu0 %v281, 96
  %v294 = vpop.permute.xlu0 %293
  %vm295 = vcmask 261120
  %v296 = vsel %vm295, %v290, 0
  %v298 = vsel %vm295, %v292, 0
  %v300 = vsel %vm295, %v294, 0
  %302 = vmatpush.msra.mxu0 0.0
  %303 = vmatpush.msra.mxu0 0.0
  %304 = vmatpush.msra.mxu0 0.0
  %305 = vmatpush.msra.mxu0 0.0
  %306 = vmatpush.msra.mxu0 0.0
  %307 = vmatpush.msra.mxu0 0.0
  %308 = vmatpush.msra.mxu0 0.0
  %309 = vmatpush.msra.mxu0 0.0
  %310 = vmatpush.msra.mxu0 0.0
  %311 = vmatpush.msra.mxu0 0.0
  %312 = vmatpush.msra.mxu0 0.0
  %313 = vmatpush.msra.mxu0 0.0
  %314 = vmatpush.msra.mxu0 %v285
  %315 = vmatpush.msra.mxu0 %v284
  %316 = vmatpush.msra.mxu0 %v283
  %317 = vmatpush.msra.mxu0 %v282
  %318 = vmatmul.f32.gmra.mxu0 %v296
  %v319 = vpop.f32.mrf.mxu0
  %v320 = vadd.f32 0.0, %v319
  %321 = vmatmul.f32.gmra.mxu0 %v298
  %v322 = vpop.f32.mrf.mxu0
  %v323 = vadd.f32 0.0, %v322
  %324 = vmatmul.f32.gmra.mxu0 %v300
  %v325 = vpop.f32.mrf.mxu0
  %v326 = vadd.f32 0.0, %v325
  %327 = vdwg.mxu0
  %328 = vst [vmem:[%s3] sm:$0xff] %v320
  %329 = vst [vmem:[%s3 + $0x8] sm:$0xff] %v323
  %330 = vst [vmem:[%s3 + $0x10] sm:$0xf] %v326
  // Predicated region
  $region14: #{rkn_layer_forward.1} parent=0 // pred_check
    _
  $region15: #{rkn_layer_forward.1} parent=0 // pred_check_branch
    %332 = sbr.rel (0) target = $region17
  $region16: #{rkn_layer_forward.1} parent=0 // pred_region
    _
  $region17: #{rkn_layer_forward.1} parent=0 // pred_fallthru
    _
  // Predicated region
  $region18: #{rkn_layer_forward.1} parent=0 // pred_check
    _
  $region19: #{rkn_layer_forward.1} parent=0 // pred_check_branch
    %334 = sbr.rel (0) target = $region21
  $region20: #{rkn_layer_forward.1} parent=0 // pred_region
    _
  $region21: #{rkn_layer_forward.1} parent=0 // pred_fallthru
    _

</llo_original>
